<compile_context>
chip_gen: v7x
topology: tpu7x:2x2x1
jax: 0.10.0
libtpu: 0.0.40
codegen_flags: <defaults>
</compile_context>

<pallas_src>
import functools

import jax
import jax.numpy as jnp
from jax import lax
from jax.experimental import pallas as pl
from jax.experimental.pallas import tpu as pltpu

EPS = 1e-5


# ----------------------------------------------------------------------------
# Parameter folding / sizing glue
# ----------------------------------------------------------------------------
def _round_up(v, m):
    return (v + m - 1) // m * m


def _fold_bn(bn):
    scale = bn['weight'] / jnp.sqrt(bn['running_var'] + EPS)
    shift = bn['bias'] - bn['running_mean'] * scale
    return scale, shift


def _conv_w_stacked(wt, cp):
    """torch conv weight (Cout, Cin, 3, 3) -> (Cout, 9*cp).

    Column block t = ky*3 + kx holds that tap's Cin weights, zero-padded to cp
    channels, matching the (9*cp, HW) tap stack built in the kernel.
    """
    cout, cin, kh, kw = wt.shape
    w = jnp.transpose(wt, (0, 2, 3, 1))                       # (Cout, 3, 3, Cin)
    w = jnp.pad(w, ((0, 0), (0, 0), (0, 0), (0, cp - cin)))
    return w.reshape(cout, kh * kw * cp)


def _vmem_capacity_bytes():
    try:
        cap = getattr(pltpu.get_tpu_info(), 'vmem_capacity_bytes', None)
        if cap:
            return int(cap)
    except Exception:
        pass
    return 64 << 20          # conservative default: v7x per-TensorCore VMEM


def _pick_tk(hw, cap):
    """Largest divisor of hw <= cap, preferring multiples of 128 (aligned k/v slices)."""
    cap = max(1, min(int(cap), hw))
    best = None
    for t in range(cap, 0, -1):
        if hw % t == 0:
            if t % 128 == 0:
                return t
            if best is None:
                best = t
    return best or 1


# ----------------------------------------------------------------------------
# In-kernel 3x3 "same" conv: build the stacked (9*CP, HW) tap operand once,
# then a single MXU matmul with contraction depth 9*CP.
# ----------------------------------------------------------------------------
def _build_tap_stack(load, stack_ref, mask_l, mask_r, *, CP, W, HW, P):
    """Write the 9 shifted + edge-masked tap slices into stack_ref (9*CP, HW).

    load(lo, hi) -> (CP, hi-lo) f32 slice of a zero-padded (CP, HW + 2P) slab.
    Tap t = ky*3 + kx; vertical out-of-image taps read the zero pad, and the
    horizontal row-wrap of a flat shift is killed by the left/right edge masks.
    """
    t = 0
    for dy in (-1, 0, 1):
        for dx in (-1, 0, 1):
            off = P + dy * W + dx
            s = load(off, off + HW)                  # (CP, HW) f32
            if dx == -1:
                s = s * mask_l
            elif dx == 1:
                s = s * mask_r
            stack_ref[t * CP:(t + 1) * CP, :] = s    # 8-aligned sublane store
            t += 1


# ----------------------------------------------------------------------------
# Fused kernel: conv1/2/3 + online-softmax attention + bn3 + conv4 + bn4
#               + gamma * out + residual
# ----------------------------------------------------------------------------
def _ca_kernel(xp_ref, mask_ref, wqkv_ref, w4_ref, s3_ref, b3_ref,
               s4g_ref, b4g_ref, o_ref,
               stack_sc, q_sc, k_sc, v_sc, m_sc, l_sc, acc_sc, zp_sc,
               *, C, CP, W, HW, P, TK, cdt, approx):
    kv = pl.program_id(1)
    nkv = pl.num_programs(1)

    @pl.when(kv == 0)
    def _init():
        mask_l = mask_ref[0:1, :]          # (1, HW) kills wrap for dx = -1 taps
        mask_r = mask_ref[1:2, :]          # (1, HW) kills wrap for dx = +1 taps
        # fused conv1|conv2|conv3: one tap stack, one 9*CP-deep matmul
        _build_tap_stack(lambda a, b: xp_ref[0, :, a:b], stack_sc, mask_l, mask_r,
                         CP=CP, W=W, HW=HW, P=P)
        qkv = jnp.dot(wqkv_ref[...], stack_sc[...],
                      preferred_element_type=jnp.float32)          # (3*CP, HW) f32
        q_sc[...] = qkv[0:CP, :].astype(cdt)
        k_sc[...] = qkv[CP:2 * CP, :].astype(cdt)
        v_sc[...] = qkv[2 * CP:3 * CP, :].astype(cdt)
        # online-softmax state
        m_sc[...] = jnp.full((1, HW), -jnp.inf, dtype=jnp.float32)
        l_sc[...] = jnp.zeros((1, HW), dtype=jnp.float32)
        acc_sc[...] = jnp.zeros((CP, HW), dtype=jnp.float32)
        # conv4 slab halos zeroed once per batch element (hoisted out of finalize)
        zp_sc[:, 0:P] = jnp.zeros((CP, P), dtype=jnp.float32)
        zp_sc[:, P + HW:P + HW + P] = jnp.zeros((CP, P), dtype=jnp.float32)

    k0 = kv * TK
    if TK % 128 == 0:
        k0 = pl.multiple_of(k0, 128)
    q = q_sc[...]                                   # (CP, HW) cdt
    kb = k_sc[:, pl.ds(k0, TK)]                     # (CP, TK) cdt
    vb = v_sc[:, pl.ds(k0, TK)]                     # (CP, TK) cdt

    # e[j, i] = energy[i, k0 + j] = sum_c k[c, k0+j] * q[c, i]  (f32 accumulation)
    e = lax.dot_general(kb, q, (((0,), (0,)), ((), ())),
                        preferred_element_type=jnp.float32)        # (TK, HW)
    m_prev = m_sc[...]
    m_new = jnp.maximum(m_prev, jnp.max(e, axis=0, keepdims=True))     # (1, HW)
    p = jnp.exp(e - m_new)                                             # (TK, HW) f32
    alpha = jnp.exp(m_prev - m_new)                                    # (1, HW)
    l_sc[...] = alpha * l_sc[...] + jnp.sum(p, axis=0, keepdims=True)
    acc_sc[...] = alpha * acc_sc[...] + jnp.dot(
        vb, p.astype(cdt), preferred_element_type=jnp.float32)
    m_sc[...] = m_new

    @pl.when(kv == nkv - 1)
    def _finalize():
        mask_l = mask_ref[0:1, :]
        mask_r = mask_ref[1:2, :]
        inv_l = pl.reciprocal(l_sc[...], approx=approx)          # softmax denom
        y = acc_sc[...] * inv_l                                  # (CP, HW) attention out
        z = y * s3_ref[...] + b3_ref[...]                        # bn3 (eval mode)
        zp_sc[:, P:P + HW] = z                                   # halos already zero
        _build_tap_stack(lambda a, b: zp_sc[:, a:b], stack_sc, mask_l, mask_r,
                         CP=CP, W=W, HW=HW, P=P)
        c4 = jnp.dot(w4_ref[...], stack_sc[...],
                     preferred_element_type=jnp.float32)         # (CP, HW)
        x_res = xp_ref[0, :, P:P + HW]                           # residual (CP, HW)
        res = c4 * s4g_ref[...] + b4g_ref[...] + x_res           # gamma*bn4 + residual
        o_ref[0] = res[0:C, :]                                   # lane-dense NCHW store


# ----------------------------------------------------------------------------
# Wrapper
# ----------------------------------------------------------------------------
def ca_module_forward(x_nchw, params, *, kv_tile=None,
                      compute_dtype=jnp.bfloat16, approx_recip=True):
    b, c, h, w = x_nchw.shape
    hw = h * w
    cp = _round_up(c, 8)                 # sublane-aligned channel dim
    pad = w + 1                          # flat pad covers all 3x3 tap offsets
    hwp = hw + 2 * pad
    cdt_size = jnp.dtype(compute_dtype).itemsize

    # ----- generation-aware kv-tile / VMEM sizing -----
    vmem_cap = _vmem_capacity_bytes()
    ep_budget = max(4 << 20, vmem_cap // 5)        # ~12.8 MiB v7x, ~25.6 MiB v5e/v6e
    bytes_per_kv_row = hw * (4 + 4 + cdt_size)     # f32 e + f32 p + cdt p per kv row
    tk_cap = max(128, ep_budget // bytes_per_kv_row)
    if kv_tile is not None:
        tk_cap = min(tk_cap, kv_tile)
    tk = _pick_tk(hw, tk_cap)
    n_kv = hw // tk

    # ----- inputs: channel-padded, flat zero-padded slab + edge masks -----
    x_flat = x_nchw.reshape(b, c, hw).astype(jnp.float32)
    x_pad = jnp.pad(x_flat, ((0, 0), (0, cp - c), (pad, pad)))       # (B, CP, HWp)

    wcol = jnp.arange(hw, dtype=jnp.int32) % w
    masks = jnp.stack([(wcol > 0), (wcol < (w - 1))],
                      axis=0).astype(jnp.float32)                    # (2, HW)

    # ----- weights: per-conv (Cout, 9*CP) stacks; conv1|2|3 fused on sublanes -----
    def _pad_rows(a):
        return jnp.pad(a, ((0, cp - a.shape[0]), (0, 0)))
    wqkv = jnp.concatenate(
        [_pad_rows(_conv_w_stacked(params['conv1'], cp)),
         _pad_rows(_conv_w_stacked(params['conv2'], cp)),
         _pad_rows(_conv_w_stacked(params['conv3'], cp))],
        axis=0).astype(jnp.float32)                                  # (3*CP, 9*CP)
    w4 = _pad_rows(_conv_w_stacked(params['conv4'], cp)).astype(jnp.float32)  # (CP, 9*CP)

    # ----- folded BatchNorm (eval mode) + gamma -----
    s3, b3 = _fold_bn(params['bn3'])
    s4, b4 = _fold_bn(params['bn4'])
    gamma = params['gamma']

    def _col(v):
        return jnp.pad(v.reshape(c, 1), ((0, cp - c), (0, 0))).astype(jnp.float32)
    s3c, b3c = _col(s3), _col(b3)
    s4g, b4g = _col(gamma * s4), _col(gamma * b4)

    # ----- VMEM limit (<= 75% of physical cap, 2x headroom over the estimate) -----
    scratch_bytes = (4 * 9 * cp * hw + 3 * cp * hw * cdt_size + 4 * 2 * hw
                     + 4 * cp * hw + 4 * cp * hwp)
    block_bytes = 2 * 4 * (cp * hwp + c * hw) + 4 * (2 * hw + int(wqkv.size)
                                                     + int(w4.size) + 4 * cp)
    temp_bytes = tk * hw * (4 + 4 + cdt_size) + 4 * (4 * cp * hw)
    vmem_limit = int(min(int(0.75 * vmem_cap),
                         max(32 << 20, 2 * (scratch_bytes + block_bytes + temp_bytes))))

    # ----- cost hint: runtime dominated by HW^2 exps + matmuls, not HBM traffic -----
    flops = b * (4 * cp * hw * hw
                 + 2 * (3 * cp) * (9 * cp) * hw
                 + 2 * cp * (9 * cp) * hw)
    transcendentals = b * (hw * hw + 2 * hw * n_kv)
    bytes_accessed = (4 * b * (cp * hwp + c * hw)
                      + 4 * (2 * hw + int(wqkv.size) + int(w4.size) + 4 * cp))

    kernel = functools.partial(_ca_kernel, C=c, CP=cp, W=w, HW=hw, P=pad, TK=tk,
                               cdt=compute_dtype, approx=approx_recip)

    out = pl.pallas_call(
        kernel,
        out_shape=jax.ShapeDtypeStruct((b, c, hw), jnp.float32),
        grid=(b, n_kv),
        in_specs=[
            pl.BlockSpec((1, cp, hwp), lambda i, j: (i, 0, 0)),      # padded x slab
            pl.BlockSpec((2, hw), lambda i, j: (0, 0)),              # edge masks
            pl.BlockSpec((3 * cp, 9 * cp), lambda i, j: (0, 0)),     # fused qkv taps
            pl.BlockSpec((cp, 9 * cp), lambda i, j: (0, 0)),         # conv4 taps
            pl.BlockSpec((cp, 1), lambda i, j: (0, 0)),              # bn3 scale
            pl.BlockSpec((cp, 1), lambda i, j: (0, 0)),              # bn3 shift
            pl.BlockSpec((cp, 1), lambda i, j: (0, 0)),              # gamma*bn4 scale
            pl.BlockSpec((cp, 1), lambda i, j: (0, 0)),              # gamma*bn4 shift
        ],
        out_specs=pl.BlockSpec((1, c, hw), lambda i, j: (i, 0, 0)),
        scratch_shapes=[
            pltpu.VMEM((9 * cp, hw), jnp.float32),     # stacked conv tap operand
            pltpu.VMEM((cp, hw), compute_dtype),       # q
            pltpu.VMEM((cp, hw), compute_dtype),       # k
            pltpu.VMEM((cp, hw), compute_dtype),       # v
            pltpu.VMEM((1, hw), jnp.float32),          # running softmax max
            pltpu.VMEM((1, hw), jnp.float32),          # running softmax denom
            pltpu.VMEM((cp, hw), jnp.float32),         # attention accumulator
            pltpu.VMEM((cp, hwp), jnp.float32),        # padded conv4 input slab
        ],
        compiler_params=pltpu.CompilerParams(
            dimension_semantics=("parallel", "arbitrary"),
            vmem_limit_bytes=vmem_limit),
        cost_estimate=pl.CostEstimate(flops=int(flops),
                                      transcendentals=int(transcendentals),
                                      bytes_accessed=int(bytes_accessed)),
    )(x_pad, masks, wqkv, w4, s3c, b3c, s4g, b4g)

    return out.reshape(b, c, h, w)       # already NCHW (no transpose needed)


# ----------------------------------------------------------------------------
# Pure-JAX reference (mirrors the PyTorch forward).  quant_dtype mimics the
# kernel's bf16 rounding points (q/k/v after the convs and the attention
# weights) for the perf-mode check; convs / bn / softmax stats stay f32.
# ----------------------------------------------------------------------------
def ca_module_reference(x, params, quant_dtype=None):
    def qd(a):
        if quant_dtype is None:
            return a
        return a.astype(quant_dtype).astype(jnp.float32)

    def conv(z, wt):
        return lax.conv_general_dilated(
            z, wt, window_strides=(1, 1), padding=((1, 1), (1, 1)),
            dimension_numbers=('NCHW', 'OIHW', 'NCHW'))

    def bn(z, p):
        scale = p['weight'] / jnp.sqrt(p['running_var'] + EPS)
        shift = p['bias'] - p['running_mean'] * scale
        return z * scale[None, :, None, None] + shift[None, :, None, None]

    b, c, h, w = x.shape
    q = qd(conv(x, params['conv1']).reshape(b, c, h * w))
    k = qd(conv(x, params['conv2']).reshape(b, c, h * w))
    v = qd(conv(x, params['conv3']).reshape(b, c, h * w))
    energy = jnp.einsum('bci,bcj->bij', q, k)                  # energy[i, j]
    attn = jax.nn.softmax(energy, axis=-1)
    out = jnp.einsum('bcj,bij->bci', v, qd(attn)).reshape(b, c, h, w)
    out = bn(conv(bn(out, params['bn3']), params['conv4']), params['bn4'])
    return params['gamma'] * out + x


# ----------------------------------------------------------------------------
if __name__ == "__main__":
    key = jax.random.PRNGKey(0)
    B, C, H, W = 2, 4, 16, 16          # in_channels == out_channels (required by .view)
    ks = jax.random.split(key, 8)
    std = (2.0 / (C * 9)) ** 0.5

    def bn_params(k):
        k1, k2, k3, k4 = jax.random.split(k, 4)
        return {'weight': 1.0 + 0.1 * jax.random.normal(k1, (C,)),
                'bias': 0.1 * jax.random.normal(k2, (C,)),
                'running_mean': 0.1 * jax.random.normal(k3, (C,)),
                'running_var': jax.random.uniform(k4, (C,), minval=0.5, maxval=1.5)}

    params = {
        'conv1': std * jax.random.normal(ks[0], (C, C, 3, 3)),
        'conv2': std * jax.random.normal(ks[1], (C, C, 3, 3)),
        'conv3': std * jax.random.normal(ks[2], (C, C, 3, 3)),
        'conv4': std * jax.random.normal(ks[3], (C, C, 3, 3)),
        'bn3': bn_params(ks[4]),
        'bn4': bn_params(ks[5]),
        'gamma': jnp.float32(0.75),    # torch inits to 0; nonzero to exercise the path
    }
    x = jax.random.normal(ks[6], (B, C, H, W), dtype=jnp.float32)

    ref_f32 = jax.block_until_ready(ca_module_reference(x, params))
    ref_bf16 = jax.block_until_ready(
        ca_module_reference(x, params, quant_dtype=jnp.bfloat16))

    # Mode 1 (exact math): f32 operands, exact reciprocal.  kv_tile=128 forces the
    # online softmax to carry state across 2 kv steps at HW=256.
    out_f32 = jax.block_until_ready(
        ca_module_forward(x, params, kv_tile=128,
                          compute_dtype=jnp.float32, approx_recip=False))
    assert out_f32.shape == (B, C, H, W)
    err_f32 = float(jnp.max(jnp.abs(out_f32 - ref_f32)))
    assert jnp.allclose(out_f32, ref_f32, atol=1e-3, rtol=1e-3), f"f32 max_err={err_f32}"

    # Mode 2 (perf dtype): bf16 q/k/v/p matmul operands (f32 accumulation, f32
    # softmax stats, f32 convs) + approximate reciprocal, checked against a
    # reference that rounds the same quantities to bf16.
    out_bf16 = jax.block_until_ready(
        ca_module_forward(x, params, kv_tile=128,
                          compute_dtype=jnp.bfloat16, approx_recip=True))
    err_bf16 = float(jnp.max(jnp.abs(out_bf16 - ref_bf16)))
    assert jnp.allclose(out_bf16, ref_bf16, atol=1e-1, rtol=1e-1), f"bf16 max_err={err_bf16}"

    # Mode 3 (auto config): generation-aware TK (single kv step at HW=256).
    out_auto = jax.block_until_ready(ca_module_forward(x, params))
    err_auto = float(jnp.max(jnp.abs(out_auto - ref_bf16)))
    assert jnp.allclose(out_auto, ref_bf16, atol=1e-1, rtol=1e-1), f"auto max_err={err_auto}"

    print("KERNEL_OK")
</pallas_src>

<mosaic_0001>
module attributes {stable_mosaic.version = 11 : i64} {
  func.func @_ca_kernel(%arg0: i32, %arg1: i32, %arg2: memref<1x8x290xf32, #tpu.memory_space<vmem>>, %arg3: memref<2x256xf32, #tpu.memory_space<vmem>>, %arg4: memref<24x72xf32, #tpu.memory_space<vmem>>, %arg5: memref<8x72xf32, #tpu.memory_space<vmem>>, %arg6: memref<8x1xf32, #tpu.memory_space<vmem>>, %arg7: memref<8x1xf32, #tpu.memory_space<vmem>>, %arg8: memref<8x1xf32, #tpu.memory_space<vmem>>, %arg9: memref<8x1xf32, #tpu.memory_space<vmem>>, %arg10: memref<1x4x256xf32, #tpu.memory_space<vmem>>, %arg11: memref<72x256xf32, #tpu.memory_space<vmem>>, %arg12: memref<8x256xf32, #tpu.memory_space<vmem>>, %arg13: memref<8x256xf32, #tpu.memory_space<vmem>>, %arg14: memref<8x256xf32, #tpu.memory_space<vmem>>, %arg15: memref<1x256xf32, #tpu.memory_space<vmem>>, %arg16: memref<1x256xf32, #tpu.memory_space<vmem>>, %arg17: memref<8x256xf32, #tpu.memory_space<vmem>>, %arg18: memref<8x290xf32, #tpu.memory_space<vmem>>) attributes {dimension_semantics = [#tpu.dimension_semantics<parallel>, #tpu.dimension_semantics<arbitrary>], iteration_bounds = array<i64: 2, 2>, scalar_prefetch = 0 : i64, scratch_operands = 8 : i64, tpu.core_type = #tpu.core_type<tc>, window_params = [{transform_indices = @transform_0, window_bounds = array<i64: 1, 8, 290>}, {pipeline_mode = #tpu.pipeline_mode<synchronous>, transform_indices = @transform_1, window_bounds = array<i64: 2, 256>}, {pipeline_mode = #tpu.pipeline_mode<synchronous>, transform_indices = @transform_2, window_bounds = array<i64: 24, 72>}, {pipeline_mode = #tpu.pipeline_mode<synchronous>, transform_indices = @transform_3, window_bounds = array<i64: 8, 72>}, {pipeline_mode = #tpu.pipeline_mode<synchronous>, transform_indices = @transform_4, window_bounds = array<i64: 8, 1>}, {pipeline_mode = #tpu.pipeline_mode<synchronous>, transform_indices = @transform_5, window_bounds = array<i64: 8, 1>}, {pipeline_mode = #tpu.pipeline_mode<synchronous>, transform_indices = @transform_6, window_bounds = array<i64: 8, 1>}, {pipeline_mode = #tpu.pipeline_mode<synchronous>, transform_indices = @transform_7, window_bounds = array<i64: 8, 1>}, {transform_indices = @transform_8, window_bounds = array<i64: 1, 4, 256>}]} {
    %c0_i32 = arith.constant 0 : i32
    %0 = arith.cmpi eq, %arg1, %c0_i32 : i32
    %1 = arith.extui %0 : i1 to i32
    %c0_i32_0 = arith.constant 0 : i32
    %2 = arith.cmpi ne, %1, %c0_i32_0 : i32
    scf.if %2 {
      %c0_20 = arith.constant 0 : index
      %c0_21 = arith.constant 0 : index
      %36 = vector.load %arg3[%c0_20, %c0_21] : memref<2x256xf32, #tpu.memory_space<vmem>>, vector<1x256xf32>
      %c1 = arith.constant 1 : index
      %c0_22 = arith.constant 0 : index
      %37 = vector.load %arg3[%c1, %c0_22] : memref<2x256xf32, #tpu.memory_space<vmem>>, vector<1x256xf32>
      %c0_23 = arith.constant 0 : index
      %c0_24 = arith.constant 0 : index
      %c0_25 = arith.constant 0 : index
      %38 = vector.load %arg2[%c0_23, %c0_24, %c0_25] : memref<1x8x290xf32, #tpu.memory_space<vmem>>, vector<1x8x256xf32>
      %39 = vector.shape_cast %38 : vector<1x8x256xf32> to vector<8x256xf32>
      %40 = vector.broadcast %36 : vector<1x256xf32> to vector<8x256xf32>
      %41 = arith.mulf %39, %40 : vector<8x256xf32>
      %c0_26 = arith.constant 0 : index
      %c0_27 = arith.constant 0 : index
      %42 = vector.load %arg11[%c0_26, %c0_27] : memref<72x256xf32, #tpu.memory_space<vmem>>, vector<8x256xf32>
      tpu.vector_store %arg11[%c0_26, %c0_27], %41 {strides = array<i32>} : memref<72x256xf32, #tpu.memory_space<vmem>>, vector<8x256xf32>,
      %c0_28 = arith.constant 0 : index
      %c0_29 = arith.constant 0 : index
      %c1_30 = arith.constant 1 : index
      %43 = vector.load %arg2[%c0_28, %c0_29, %c1_30] : memref<1x8x290xf32, #tpu.memory_space<vmem>>, vector<1x8x256xf32>
      %44 = vector.shape_cast %43 : vector<1x8x256xf32> to vector<8x256xf32>
      %c8 = arith.constant 8 : index
      %c0_31 = arith.constant 0 : index
      %45 = vector.load %arg11[%c8, %c0_31] : memref<72x256xf32, #tpu.memory_space<vmem>>, vector<8x256xf32>
      tpu.vector_store %arg11[%c8, %c0_31], %44 {strides = array<i32>} : memref<72x256xf32, #tpu.memory_space<vmem>>, vector<8x256xf32>,
      %c0_32 = arith.constant 0 : index
      %c0_33 = arith.constant 0 : index
      %c2 = arith.constant 2 : index
      %46 = vector.load %arg2[%c0_32, %c0_33, %c2] : memref<1x8x290xf32, #tpu.memory_space<vmem>>, vector<1x8x256xf32>
      %47 = vector.shape_cast %46 : vector<1x8x256xf32> to vector<8x256xf32>
      %48 = vector.broadcast %37 : vector<1x256xf32> to vector<8x256xf32>
      %49 = arith.mulf %47, %48 : vector<8x256xf32>
      %c16 = arith.constant 16 : index
      %c0_34 = arith.constant 0 : index
      %50 = vector.load %arg11[%c16, %c0_34] : memref<72x256xf32, #tpu.memory_space<vmem>>, vector<8x256xf32>
      tpu.vector_store %arg11[%c16, %c0_34], %49 {strides = array<i32>} : memref<72x256xf32, #tpu.memory_space<vmem>>, vector<8x256xf32>,
      %c0_35 = arith.constant 0 : index
      %c0_36 = arith.constant 0 : index
      %c16_37 = arith.constant 16 : index
      %51 = vector.load %arg2[%c0_35, %c0_36, %c16_37] : memref<1x8x290xf32, #tpu.memory_space<vmem>>, vector<1x8x256xf32>
      %52 = vector.shape_cast %51 : vector<1x8x256xf32> to vector<8x256xf32>
      %53 = vector.broadcast %36 : vector<1x256xf32> to vector<8x256xf32>
      %54 = arith.mulf %52, %53 : vector<8x256xf32>
      %c24 = arith.constant 24 : index
      %c0_38 = arith.constant 0 : index
      %55 = vector.load %arg11[%c24, %c0_38] : memref<72x256xf32, #tpu.memory_space<vmem>>, vector<8x256xf32>
      tpu.vector_store %arg11[%c24, %c0_38], %54 {strides = array<i32>} : memref<72x256xf32, #tpu.memory_space<vmem>>, vector<8x256xf32>,
      %c0_39 = arith.constant 0 : index
      %c0_40 = arith.constant 0 : index
      %c17 = arith.constant 17 : index
      %56 = vector.load %arg2[%c0_39, %c0_40, %c17] : memref<1x8x290xf32, #tpu.memory_space<vmem>>, vector<1x8x256xf32>
      %57 = vector.shape_cast %56 : vector<1x8x256xf32> to vector<8x256xf32>
      %c32 = arith.constant 32 : index
      %c0_41 = arith.constant 0 : index
      %58 = vector.load %arg11[%c32, %c0_41] : memref<72x256xf32, #tpu.memory_space<vmem>>, vector<8x256xf32>
      tpu.vector_store %arg11[%c32, %c0_41], %57 {strides = array<i32>} : memref<72x256xf32, #tpu.memory_space<vmem>>, vector<8x256xf32>,
      %c0_42 = arith.constant 0 : index
      %c0_43 = arith.constant 0 : index
      %c18 = arith.constant 18 : index
      %59 = vector.load %arg2[%c0_42, %c0_43, %c18] : memref<1x8x290xf32, #tpu.memory_space<vmem>>, vector<1x8x256xf32>
      %60 = vector.shape_cast %59 : vector<1x8x256xf32> to vector<8x256xf32>
      %61 = vector.broadcast %37 : vector<1x256xf32> to vector<8x256xf32>
      %62 = arith.mulf %60, %61 : vector<8x256xf32>
      %c40 = arith.constant 40 : index
      %c0_44 = arith.constant 0 : index
      %63 = vector.load %arg11[%c40, %c0_44] : memref<72x256xf32, #tpu.memory_space<vmem>>, vector<8x256xf32>
      tpu.vector_store %arg11[%c40, %c0_44], %62 {strides = array<i32>} : memref<72x256xf32, #tpu.memory_space<vmem>>, vector<8x256xf32>,
      %c0_45 = arith.constant 0 : index
      %c0_46 = arith.constant 0 : index
      %c32_47 = arith.constant 32 : index
      %64 = vector.load %arg2[%c0_45, %c0_46, %c32_47] : memref<1x8x290xf32, #tpu.memory_space<vmem>>, vector<1x8x256xf32>
      %65 = vector.shape_cast %64 : vector<1x8x256xf32> to vector<8x256xf32>
      %66 = vector.broadcast %36 : vector<1x256xf32> to vector<8x256xf32>
      %67 = arith.mulf %65, %66 : vector<8x256xf32>
      %c48 = arith.constant 48 : index
      %c0_48 = arith.constant 0 : index
      %68 = vector.load %arg11[%c48, %c0_48] : memref<72x256xf32, #tpu.memory_space<vmem>>, vector<8x256xf32>
      tpu.vector_store %arg11[%c48, %c0_48], %67 {strides = array<i32>} : memref<72x256xf32, #tpu.memory_space<vmem>>, vector<8x256xf32>,
      %c0_49 = arith.constant 0 : index
      %c0_50 = arith.constant 0 : index
      %c33 = arith.constant 33 : index
      %69 = vector.load %arg2[%c0_49, %c0_50, %c33] : memref<1x8x290xf32, #tpu.memory_space<vmem>>, vector<1x8x256xf32>
      %70 = vector.shape_cast %69 : vector<1x8x256xf32> to vector<8x256xf32>
      %c56 = arith.constant 56 : index
      %c0_51 = arith.constant 0 : index
      %71 = vector.load %arg11[%c56, %c0_51] : memref<72x256xf32, #tpu.memory_space<vmem>>, vector<8x256xf32>
      tpu.vector_store %arg11[%c56, %c0_51], %70 {strides = array<i32>} : memref<72x256xf32, #tpu.memory_space<vmem>>, vector<8x256xf32>,
      %c0_52 = arith.constant 0 : index
      %c0_53 = arith.constant 0 : index
      %c34 = arith.constant 34 : index
      %72 = vector.load %arg2[%c0_52, %c0_53, %c34] : memref<1x8x290xf32, #tpu.memory_space<vmem>>, vector<1x8x256xf32>
      %73 = vector.shape_cast %72 : vector<1x8x256xf32> to vector<8x256xf32>
      %74 = vector.broadcast %37 : vector<1x256xf32> to vector<8x256xf32>
      %75 = arith.mulf %73, %74 : vector<8x256xf32>
      %c64 = arith.constant 64 : index
      %c0_54 = arith.constant 0 : index
      %76 = vector.load %arg11[%c64, %c0_54] : memref<72x256xf32, #tpu.memory_space<vmem>>, vector<8x256xf32>
      tpu.vector_store %arg11[%c64, %c0_54], %75 {strides = array<i32>} : memref<72x256xf32, #tpu.memory_space<vmem>>, vector<8x256xf32>,
      %c0_55 = arith.constant 0 : index
      %c0_56 = arith.constant 0 : index
      %77 = vector.load %arg4[%c0_55, %c0_56] : memref<24x72xf32, #tpu.memory_space<vmem>>, vector<24x72xf32>
      %c0_57 = arith.constant 0 : index
      %c0_58 = arith.constant 0 : index
      %78 = vector.load %arg11[%c0_57, %c0_58] : memref<72x256xf32, #tpu.memory_space<vmem>>, vector<72x256xf32>
      %cst_59 = arith.constant dense<0.000000e+00> : vector<24x256xf32>
      %79 = tpu.matmul %77, %78, %cst_59 {dimension_numbers = #tpu.dot_dimension_numbers<[1], [0], [0], [1], [0, 0, 1, 1], [], []>} : vector<24x72xf32>, vector<72x256xf32>, vector<24x256xf32> -> vector<24x256xf32>
      %80 = vector.extract_strided_slice %79 {offsets = [0, 0], sizes = [8, 256], strides = [1, 1]} : vector<24x256xf32> to vector<8x256xf32>
      %c0_60 = arith.constant 0 : index
      %c0_61 = arith.constant 0 : index
      %81 = vector.load %arg12[%c0_60, %c0_61] : memref<8x256xf32, #tpu.memory_space<vmem>>, vector<8x256xf32>
      tpu.vector_store %arg12[%c0_60, %c0_61], %80 {strides = array<i32>} : memref<8x256xf32, #tpu.memory_space<vmem>>, vector<8x256xf32>,
      %82 = vector.extract_strided_slice %79 {offsets = [8, 0], sizes = [8, 256], strides = [1, 1]} : vector<24x256xf32> to vector<8x256xf32>
      %c0_62 = arith.constant 0 : index
      %c0_63 = arith.constant 0 : index
      %83 = vector.load %arg13[%c0_62, %c0_63] : memref<8x256xf32, #tpu.memory_space<vmem>>, vector<8x256xf32>
      tpu.vector_store %arg13[%c0_62, %c0_63], %82 {strides = array<i32>} : memref<8x256xf32, #tpu.memory_space<vmem>>, vector<8x256xf32>,
      %84 = vector.extract_strided_slice %79 {offsets = [16, 0], sizes = [8, 256], strides = [1, 1]} : vector<24x256xf32> to vector<8x256xf32>
      %c0_64 = arith.constant 0 : index
      %c0_65 = arith.constant 0 : index
      %85 = vector.load %arg14[%c0_64, %c0_65] : memref<8x256xf32, #tpu.memory_space<vmem>>, vector<8x256xf32>
      tpu.vector_store %arg14[%c0_64, %c0_65], %84 {strides = array<i32>} : memref<8x256xf32, #tpu.memory_space<vmem>>, vector<8x256xf32>,
      %cst_66 = arith.constant 0xFF800000 : f32
      %86 = vector.broadcast %cst_66 : f32 to vector<1x256xf32>
      %c0_67 = arith.constant 0 : index
      %c0_68 = arith.constant 0 : index
      %87 = vector.load %arg15[%c0_67, %c0_68] : memref<1x256xf32, #tpu.memory_space<vmem>>, vector<1x256xf32>
      tpu.vector_store %arg15[%c0_67, %c0_68], %86 {strides = array<i32>} : memref<1x256xf32, #tpu.memory_space<vmem>>, vector<1x256xf32>,
      %cst_69 = arith.constant 0.000000e+00 : f32
      %88 = vector.broadcast %cst_69 : f32 to vector<1x256xf32>
      %c0_70 = arith.constant 0 : index
      %c0_71 = arith.constant 0 : index
      %89 = vector.load %arg16[%c0_70, %c0_71] : memref<1x256xf32, #tpu.memory_space<vmem>>, vector<1x256xf32>
      tpu.vector_store %arg16[%c0_70, %c0_71], %88 {strides = array<i32>} : memref<1x256xf32, #tpu.memory_space<vmem>>, vector<1x256xf32>,
      %cst_72 = arith.constant 0.000000e+00 : f32
      %90 = vector.broadcast %cst_72 : f32 to vector<8x256xf32>
      %c0_73 = arith.constant 0 : index
      %c0_74 = arith.constant 0 : index
      %91 = vector.load %arg17[%c0_73, %c0_74] : memref<8x256xf32, #tpu.memory_space<vmem>>, vector<8x256xf32>
      tpu.vector_store %arg17[%c0_73, %c0_74], %90 {strides = array<i32>} : memref<8x256xf32, #tpu.memory_space<vmem>>, vector<8x256xf32>,
      %cst_75 = arith.constant 0.000000e+00 : f32
      %92 = vector.broadcast %cst_75 : f32 to vector<8x17xf32>
      %c0_76 = arith.constant 0 : index
      %c0_77 = arith.constant 0 : index
      %93 = vector.load %arg18[%c0_76, %c0_77] : memref<8x290xf32, #tpu.memory_space<vmem>>, vector<8x17xf32>
      tpu.vector_store %arg18[%c0_76, %c0_77], %92 {strides = array<i32>} : memref<8x290xf32, #tpu.memory_space<vmem>>, vector<8x17xf32>,
      %cst_78 = arith.constant 0.000000e+00 : f32
      %94 = vector.broadcast %cst_78 : f32 to vector<8x17xf32>
      %c0_79 = arith.constant 0 : index
      %c273 = arith.constant 273 : index
      %95 = vector.load %arg18[%c0_79, %c273] : memref<8x290xf32, #tpu.memory_space<vmem>>, vector<8x17xf32>
      tpu.vector_store %arg18[%c0_79, %c273], %94 {strides = array<i32>} : memref<8x290xf32, #tpu.memory_space<vmem>>, vector<8x17xf32>,
    } else {
    }
    %c128_i32 = arith.constant 128 : i32
    %3 = arith.muli %arg1, %c128_i32 : i32
    %4 = tpu.assume_multiple %3, 128 : i32
    %c0 = arith.constant 0 : index
    %c0_1 = arith.constant 0 : index
    %5 = vector.load %arg12[%c0, %c0_1] : memref<8x256xf32, #tpu.memory_space<vmem>>, vector<8x256xf32>
    %c0_2 = arith.constant 0 : index
    %6 = arith.index_cast %4 : i32 to index
    %7 = vector.load %arg13[%c0_2, %6] : memref<8x256xf32, #tpu.memory_space<vmem>>, vector<8x128xf32>
    %c0_3 = arith.constant 0 : index
    %8 = arith.index_cast %4 : i32 to index
    %9 = vector.load %arg14[%c0_3, %8] : memref<8x256xf32, #tpu.memory_space<vmem>>, vector<8x128xf32>
    %cst = arith.constant dense<0.000000e+00> : vector<128x256xf32>
    %10 = tpu.matmul %7, %5, %cst {dimension_numbers = #tpu.dot_dimension_numbers<[0], [0], [1], [1], [0, 1, 1, 1], [], []>} : vector<8x128xf32>, vector<8x256xf32>, vector<128x256xf32> -> vector<128x256xf32>
    %c0_4 = arith.constant 0 : index
    %c0_5 = arith.constant 0 : index
    %11 = vector.load %arg15[%c0_4, %c0_5] : memref<1x256xf32, #tpu.memory_space<vmem>>, vector<1x256xf32>
    %cst_6 = arith.constant dense<0xFF800000> : vector<256xf32>
    %12 = vector.multi_reduction <maximumf>, %10, %cst_6 [0] : vector<128x256xf32> to vector<256xf32>
    %13 = vector.shape_cast %12 : vector<256xf32> to vector<1x256xf32>
    %14 = arith.maximumf %11, %13 : vector<1x256xf32>
    %15 = vector.broadcast %14 : vector<1x256xf32> to vector<128x256xf32>
    %16 = arith.subf %10, %15 : vector<128x256xf32>
    %17 = math.exp %16 : vector<128x256xf32>
    %18 = arith.subf %11, %14 : vector<1x256xf32>
    %19 = math.exp %18 : vector<1x256xf32>
    %c0_7 = arith.constant 0 : index
    %c0_8 = arith.constant 0 : index
    %20 = vector.load %arg16[%c0_7, %c0_8] : memref<1x256xf32, #tpu.memory_space<vmem>>, vector<1x256xf32>
    %21 = arith.mulf %19, %20 : vector<1x256xf32>
    %cst_9 = arith.constant dense<0.000000e+00> : vector<256xf32>
    %22 = vector.multi_reduction <add>, %17, %cst_9 [0] : vector<128x256xf32> to vector<256xf32>
    %23 = vector.shape_cast %22 : vector<256xf32> to vector<1x256xf32>
    %24 = arith.addf %21, %23 : vector<1x256xf32>
    %c0_10 = arith.constant 0 : index
    %c0_11 = arith.constant 0 : index
    %25 = vector.load %arg16[%c0_10, %c0_11] : memref<1x256xf32, #tpu.memory_space<vmem>>, vector<1x256xf32>
    tpu.vector_store %arg16[%c0_10, %c0_11], %24 {strides = array<i32>} : memref<1x256xf32, #tpu.memory_space<vmem>>, vector<1x256xf32>,
    %c0_12 = arith.constant 0 : index
    %c0_13 = arith.constant 0 : index
    %26 = vector.load %arg17[%c0_12, %c0_13] : memref<8x256xf32, #tpu.memory_space<vmem>>, vector<8x256xf32>
    %27 = vector.broadcast %19 : vector<1x256xf32> to vector<8x256xf32>
    %28 = arith.mulf %27, %26 : vector<8x256xf32>
    %cst_14 = arith.constant dense<0.000000e+00> : vector<8x256xf32>
    %29 = tpu.matmul %9, %17, %cst_14 {dimension_numbers = #tpu.dot_dimension_numbers<[1], [0], [0], [1], [0, 0, 1, 1], [], []>} : vector<8x128xf32>, vector<128x256xf32>, vector<8x256xf32> -> vector<8x256xf32>
    %30 = arith.addf %28, %29 : vector<8x256xf32>
    %c0_15 = arith.constant 0 : index
    %c0_16 = arith.constant 0 : index
    %31 = vector.load %arg17[%c0_15, %c0_16] : memref<8x256xf32, #tpu.memory_space<vmem>>, vector<8x256xf32>
    tpu.vector_store %arg17[%c0_15, %c0_16], %30 {strides = array<i32>} : memref<8x256xf32, #tpu.memory_space<vmem>>, vector<8x256xf32>,
    %c0_17 = arith.constant 0 : index
    %c0_18 = arith.constant 0 : index
    %32 = vector.load %arg15[%c0_17, %c0_18] : memref<1x256xf32, #tpu.memory_space<vmem>>, vector<1x256xf32>
    tpu.vector_store %arg15[%c0_17, %c0_18], %14 {strides = array<i32>} : memref<1x256xf32, #tpu.memory_space<vmem>>, vector<1x256xf32>,
    %c1_i32 = arith.constant 1 : i32
    %33 = arith.cmpi eq, %arg1, %c1_i32 : i32
    %34 = arith.extui %33 : i1 to i32
    %c0_i32_19 = arith.constant 0 : i32
    %35 = arith.cmpi ne, %34, %c0_i32_19 : i32
    scf.if %35 {
      %c0_20 = arith.constant 0 : index
      %c0_21 = arith.constant 0 : index
      %36 = vector.load %arg3[%c0_20, %c0_21] : memref<2x256xf32, #tpu.memory_space<vmem>>, vector<1x256xf32>
      %c1 = arith.constant 1 : index
      %c0_22 = arith.constant 0 : index
      %37 = vector.load %arg3[%c1, %c0_22] : memref<2x256xf32, #tpu.memory_space<vmem>>, vector<1x256xf32>
      %c0_23 = arith.constant 0 : index
      %c0_24 = arith.constant 0 : index
      %38 = vector.load %arg16[%c0_23, %c0_24] : memref<1x256xf32, #tpu.memory_space<vmem>>, vector<1x256xf32>
      %39 = tpu.reciprocal %38 : vector<1x256xf32> -> vector<1x256xf32>
      %c0_25 = arith.constant 0 : index
      %c0_26 = arith.constant 0 : index
      %40 = vector.load %arg17[%c0_25, %c0_26] : memref<8x256xf32, #tpu.memory_space<vmem>>, vector<8x256xf32>
      %41 = vector.broadcast %39 : vector<1x256xf32> to vector<8x256xf32>
      %42 = arith.mulf %40, %41 : vector<8x256xf32>
      %c0_27 = arith.constant 0 : index
      %c0_28 = arith.constant 0 : index
      %43 = vector.load %arg6[%c0_27, %c0_28] : memref<8x1xf32, #tpu.memory_space<vmem>>, vector<8x1xf32>
      %44 = vector.broadcast %43 : vector<8x1xf32> to vector<8x256xf32>
      %45 = arith.mulf %42, %44 : vector<8x256xf32>
      %c0_29 = arith.constant 0 : index
      %c0_30 = arith.constant 0 : index
      %46 = vector.load %arg7[%c0_29, %c0_30] : memref<8x1xf32, #tpu.memory_space<vmem>>, vector<8x1xf32>
      %47 = vector.broadcast %46 : vector<8x1xf32> to vector<8x256xf32>
      %48 = arith.addf %45, %47 : vector<8x256xf32>
      %c0_31 = arith.constant 0 : index
      %c17 = arith.constant 17 : index
      %49 = vector.load %arg18[%c0_31, %c17] : memref<8x290xf32, #tpu.memory_space<vmem>>, vector<8x256xf32>
      tpu.vector_store %arg18[%c0_31, %c17], %48 {strides = array<i32>} : memref<8x290xf32, #tpu.memory_space<vmem>>, vector<8x256xf32>,
      %c0_32 = arith.constant 0 : index
      %c0_33 = arith.constant 0 : index
      %50 = vector.load %arg18[%c0_32, %c0_33] : memref<8x290xf32, #tpu.memory_space<vmem>>, vector<8x256xf32>
      %51 = vector.broadcast %36 : vector<1x256xf32> to vector<8x256xf32>
      %52 = arith.mulf %50, %51 : vector<8x256xf32>
      %c0_34 = arith.constant 0 : index
      %c0_35 = arith.constant 0 : index
      %53 = vector.load %arg11[%c0_34, %c0_35] : memref<72x256xf32, #tpu.memory_space<vmem>>, vector<8x256xf32>
      tpu.vector_store %arg11[%c0_34, %c0_35], %52 {strides = array<i32>} : memref<72x256xf32, #tpu.memory_space<vmem>>, vector<8x256xf32>,
      %c0_36 = arith.constant 0 : index
      %c1_37 = arith.constant 1 : index
      %54 = vector.load %arg18[%c0_36, %c1_37] : memref<8x290xf32, #tpu.memory_space<vmem>>, vector<8x256xf32>
      %c8 = arith.constant 8 : index
      %c0_38 = arith.constant 0 : index
      %55 = vector.load %arg11[%c8, %c0_38] : memref<72x256xf32, #tpu.memory_space<vmem>>, vector<8x256xf32>
      tpu.vector_store %arg11[%c8, %c0_38], %54 {strides = array<i32>} : memref<72x256xf32, #tpu.memory_space<vmem>>, vector<8x256xf32>,
      %c0_39 = arith.constant 0 : index
      %c2 = arith.constant 2 : index
      %56 = vector.load %arg18[%c0_39, %c2] : memref<8x290xf32, #tpu.memory_space<vmem>>, vector<8x256xf32>
      %57 = vector.broadcast %37 : vector<1x256xf32> to vector<8x256xf32>
      %58 = arith.mulf %56, %57 : vector<8x256xf32>
      %c16 = arith.constant 16 : index
      %c0_40 = arith.constant 0 : index
      %59 = vector.load %arg11[%c16, %c0_40] : memref<72x256xf32, #tpu.memory_space<vmem>>, vector<8x256xf32>
      tpu.vector_store %arg11[%c16, %c0_40], %58 {strides = array<i32>} : memref<72x256xf32, #tpu.memory_space<vmem>>, vector<8x256xf32>,
      %c0_41 = arith.constant 0 : index
      %c16_42 = arith.constant 16 : index
      %60 = vector.load %arg18[%c0_41, %c16_42] : memref<8x290xf32, #tpu.memory_space<vmem>>, vector<8x256xf32>
      %61 = vector.broadcast %36 : vector<1x256xf32> to vector<8x256xf32>
      %62 = arith.mulf %60, %61 : vector<8x256xf32>
      %c24 = arith.constant 24 : index
      %c0_43 = arith.constant 0 : index
      %63 = vector.load %arg11[%c24, %c0_43] : memref<72x256xf32, #tpu.memory_space<vmem>>, vector<8x256xf32>
      tpu.vector_store %arg11[%c24, %c0_43], %62 {strides = array<i32>} : memref<72x256xf32, #tpu.memory_space<vmem>>, vector<8x256xf32>,
      %c0_44 = arith.constant 0 : index
      %c17_45 = arith.constant 17 : index
      %64 = vector.load %arg18[%c0_44, %c17_45] : memref<8x290xf32, #tpu.memory_space<vmem>>, vector<8x256xf32>
      %c32 = arith.constant 32 : index
      %c0_46 = arith.constant 0 : index
      %65 = vector.load %arg11[%c32, %c0_46] : memref<72x256xf32, #tpu.memory_space<vmem>>, vector<8x256xf32>
      tpu.vector_store %arg11[%c32, %c0_46], %64 {strides = array<i32>} : memref<72x256xf32, #tpu.memory_space<vmem>>, vector<8x256xf32>,
      %c0_47 = arith.constant 0 : index
      %c18 = arith.constant 18 : index
      %66 = vector.load %arg18[%c0_47, %c18] : memref<8x290xf32, #tpu.memory_space<vmem>>, vector<8x256xf32>
      %67 = vector.broadcast %37 : vector<1x256xf32> to vector<8x256xf32>
      %68 = arith.mulf %66, %67 : vector<8x256xf32>
      %c40 = arith.constant 40 : index
      %c0_48 = arith.constant 0 : index
      %69 = vector.load %arg11[%c40, %c0_48] : memref<72x256xf32, #tpu.memory_space<vmem>>, vector<8x256xf32>
      tpu.vector_store %arg11[%c40, %c0_48], %68 {strides = array<i32>} : memref<72x256xf32, #tpu.memory_space<vmem>>, vector<8x256xf32>,
      %c0_49 = arith.constant 0 : index
      %c32_50 = arith.constant 32 : index
      %70 = vector.load %arg18[%c0_49, %c32_50] : memref<8x290xf32, #tpu.memory_space<vmem>>, vector<8x256xf32>
      %71 = vector.broadcast %36 : vector<1x256xf32> to vector<8x256xf32>
      %72 = arith.mulf %70, %71 : vector<8x256xf32>
      %c48 = arith.constant 48 : index
      %c0_51 = arith.constant 0 : index
      %73 = vector.load %arg11[%c48, %c0_51] : memref<72x256xf32, #tpu.memory_space<vmem>>, vector<8x256xf32>
      tpu.vector_store %arg11[%c48, %c0_51], %72 {strides = array<i32>} : memref<72x256xf32, #tpu.memory_space<vmem>>, vector<8x256xf32>,
      %c0_52 = arith.constant 0 : index
      %c33 = arith.constant 33 : index
      %74 = vector.load %arg18[%c0_52, %c33] : memref<8x290xf32, #tpu.memory_space<vmem>>, vector<8x256xf32>
      %c56 = arith.constant 56 : index
      %c0_53 = arith.constant 0 : index
      %75 = vector.load %arg11[%c56, %c0_53] : memref<72x256xf32, #tpu.memory_space<vmem>>, vector<8x256xf32>
      tpu.vector_store %arg11[%c56, %c0_53], %74 {strides = array<i32>} : memref<72x256xf32, #tpu.memory_space<vmem>>, vector<8x256xf32>,
      %c0_54 = arith.constant 0 : index
      %c34 = arith.constant 34 : index
      %76 = vector.load %arg18[%c0_54, %c34] : memref<8x290xf32, #tpu.memory_space<vmem>>, vector<8x256xf32>
      %77 = vector.broadcast %37 : vector<1x256xf32> to vector<8x256xf32>
      %78 = arith.mulf %76, %77 : vector<8x256xf32>
      %c64 = arith.constant 64 : index
      %c0_55 = arith.constant 0 : index
      %79 = vector.load %arg11[%c64, %c0_55] : memref<72x256xf32, #tpu.memory_space<vmem>>, vector<8x256xf32>
      tpu.vector_store %arg11[%c64, %c0_55], %78 {strides = array<i32>} : memref<72x256xf32, #tpu.memory_space<vmem>>, vector<8x256xf32>,
      %c0_56 = arith.constant 0 : index
      %c0_57 = arith.constant 0 : index
      %80 = vector.load %arg5[%c0_56, %c0_57] : memref<8x72xf32, #tpu.memory_space<vmem>>, vector<8x72xf32>
      %c0_58 = arith.constant 0 : index
      %c0_59 = arith.constant 0 : index
      %81 = vector.load %arg11[%c0_58, %c0_59] : memref<72x256xf32, #tpu.memory_space<vmem>>, vector<72x256xf32>
      %cst_60 = arith.constant dense<0.000000e+00> : vector<8x256xf32>
      %82 = tpu.matmul %80, %81, %cst_60 {dimension_numbers = #tpu.dot_dimension_numbers<[1], [0], [0], [1], [0, 0, 1, 1], [], []>} : vector<8x72xf32>, vector<72x256xf32>, vector<8x256xf32> -> vector<8x256xf32>
      %c0_61 = arith.constant 0 : index
      %c0_62 = arith.constant 0 : index
      %c17_63 = arith.constant 17 : index
      %83 = vector.load %arg2[%c0_61, %c0_62, %c17_63] : memref<1x8x290xf32, #tpu.memory_space<vmem>>, vector<1x8x256xf32>
      %84 = vector.shape_cast %83 : vector<1x8x256xf32> to vector<8x256xf32>
      %c0_64 = arith.constant 0 : index
      %c0_65 = arith.constant 0 : index
      %85 = vector.load %arg8[%c0_64, %c0_65] : memref<8x1xf32, #tpu.memory_space<vmem>>, vector<8x1xf32>
      %86 = vector.broadcast %85 : vector<8x1xf32> to vector<8x256xf32>
      %87 = arith.mulf %82, %86 : vector<8x256xf32>
      %c0_66 = arith.constant 0 : index
      %c0_67 = arith.constant 0 : index
      %88 = vector.load %arg9[%c0_66, %c0_67] : memref<8x1xf32, #tpu.memory_space<vmem>>, vector<8x1xf32>
      %89 = vector.broadcast %88 : vector<8x1xf32> to vector<8x256xf32>
      %90 = arith.addf %87, %89 : vector<8x256xf32>
      %91 = arith.addf %90, %84 : vector<8x256xf32>
      %92 = vector.extract_strided_slice %91 {offsets = [0, 0], sizes = [4, 256], strides = [1, 1]} : vector<8x256xf32> to vector<4x256xf32>
      %c0_68 = arith.constant 0 : index
      %c0_69 = arith.constant 0 : index
      %c0_70 = arith.constant 0 : index
      %93 = vector.load %arg10[%c0_68, %c0_69, %c0_70] : memref<1x4x256xf32, #tpu.memory_space<vmem>>, vector<1x4x256xf32>
      %94 = vector.shape_cast %93 : vector<1x4x256xf32> to vector<4x256xf32>
      %95 = vector.shape_cast %92 : vector<4x256xf32> to vector<1x4x256xf32>
      tpu.vector_store %arg10[%c0_68, %c0_69, %c0_70], %95 {strides = array<i32>} : memref<1x4x256xf32, #tpu.memory_space<vmem>>, vector<1x4x256xf32>,
    } else {
    }
    return
  }
  func.func @transform_0(%arg0: i32, %arg1: i32) -> (i32, i32, i32) {
    %c0_i32 = arith.constant 0 : i32
    %c0_i32_0 = arith.constant 0 : i32
    %c0_i32_1 = arith.constant 0 : i32
    return %arg0, %c0_i32, %c0_i32_0 : i32, i32, i32
  }
  func.func @transform_1(%arg0: i32, %arg1: i32) -> (i32, i32) {
    %c0_i32 = arith.constant 0 : i32
    %c0_i32_0 = arith.constant 0 : i32
    %c0_i32_1 = arith.constant 0 : i32
    return %c0_i32, %c0_i32_0 : i32, i32
  }
  func.func @transform_2(%arg0: i32, %arg1: i32) -> (i32, i32) {
    %c0_i32 = arith.constant 0 : i32
    %c0_i32_0 = arith.constant 0 : i32
    %c0_i32_1 = arith.constant 0 : i32
    return %c0_i32, %c0_i32_0 : i32, i32
  }
  func.func @transform_3(%arg0: i32, %arg1: i32) -> (i32, i32) {
    %c0_i32 = arith.constant 0 : i32
    %c0_i32_0 = arith.constant 0 : i32
    %c0_i32_1 = arith.constant 0 : i32
    return %c0_i32, %c0_i32_0 : i32, i32
  }
  func.func @transform_4(%arg0: i32, %arg1: i32) -> (i32, i32) {
    %c0_i32 = arith.constant 0 : i32
    %c0_i32_0 = arith.constant 0 : i32
    %c0_i32_1 = arith.constant 0 : i32
    return %c0_i32, %c0_i32_0 : i32, i32
  }
  func.func @transform_5(%arg0: i32, %arg1: i32) -> (i32, i32) {
    %c0_i32 = arith.constant 0 : i32
    %c0_i32_0 = arith.constant 0 : i32
    %c0_i32_1 = arith.constant 0 : i32
    return %c0_i32, %c0_i32_0 : i32, i32
  }
  func.func @transform_6(%arg0: i32, %arg1: i32) -> (i32, i32) {
    %c0_i32 = arith.constant 0 : i32
    %c0_i32_0 = arith.constant 0 : i32
    %c0_i32_1 = arith.constant 0 : i32
    return %c0_i32, %c0_i32_0 : i32, i32
  }
  func.func @transform_7(%arg0: i32, %arg1: i32) -> (i32, i32) {
    %c0_i32 = arith.constant 0 : i32
    %c0_i32_0 = arith.constant 0 : i32
    %c0_i32_1 = arith.constant 0 : i32
    return %c0_i32, %c0_i32_0 : i32, i32
  }
  func.func @transform_8(%arg0: i32, %arg1: i32) -> (i32, i32, i32) {
    %c0_i32 = arith.constant 0 : i32
    %c0_i32_0 = arith.constant 0 : i32
    %c0_i32_1 = arith.constant 0 : i32
    return %arg0, %c0_i32, %c0_i32_0 : i32, i32, i32
  }
}

</mosaic_0001>

<llo_original>
// kernel: tpu_custom_call.1
$region0: #{tpu_custom_call.1}
  #allocation0 [shape = 'u32[]', space=smem, size = 0x4, offset = 0x4, fixed_abs, tag = 'smem constant byte address 0x4 - core index']
  #allocation1 [shape = 'u32[144,128]{1,0:T(1,128)}', space=vmem, size = 0x12000, scoped, tag = 'internal scratch']
  #allocation2 [shape = 'f32[72,256]{1,0:T(8,128)}', space=vmem, size = 0x12000, scoped, tag = 'scratch operand']
  #allocation3 [shape = 'f32[8,256]{1,0:T(8,128)}', space=vmem, size = 0x2000, scoped, tag = 'scratch operand']
  #allocation4 [shape = 'f32[8,256]{1,0:T(8,128)}', space=vmem, size = 0x2000, scoped, tag = 'scratch operand']
  #allocation5 [shape = 'f32[8,256]{1,0:T(8,128)}', space=vmem, size = 0x2000, scoped, tag = 'scratch operand']
  #allocation6 [shape = 'f32[1,256]{1,0:T(1,128)}', space=vmem, size = 0x400, scoped, tag = 'scratch operand']
  #allocation7 [shape = 'f32[1,256]{1,0:T(1,128)}', space=vmem, size = 0x400, scoped, tag = 'scratch operand']
  #allocation8 [shape = 'f32[8,256]{1,0:T(8,128)}', space=vmem, size = 0x2000, scoped, tag = 'scratch operand']
  #allocation9 [shape = 'f32[8,290]{1,0:T(8,128)}', space=vmem, size = 0x3000, scoped, tag = 'scratch operand']
  %s0 = inlined_call_operand.hbm [shape: f32[2,8,290], index: 0, kind: input, shape index: {}]
  %s1 = inlined_call_operand.vmem [shape: f32[2,256], index: 1, kind: input, shape index: {}]
  %s2 = inlined_call_operand.hbm [shape: f32[24,72], index: 2, kind: input, shape index: {}]
  %s3 = inlined_call_operand.vmem [shape: f32[8,72], index: 3, kind: input, shape index: {}]
  %s4 = inlined_call_operand.vmem [shape: f32[8,1], index: 4, kind: input, shape index: {}]
  %s5 = inlined_call_operand.vmem [shape: f32[8,1], index: 5, kind: input, shape index: {}]
  %s6 = inlined_call_operand.vmem [shape: f32[8,1], index: 6, kind: input, shape index: {}]
  %s7 = inlined_call_operand.vmem [shape: f32[8,1], index: 7, kind: input, shape index: {}]
  %s8 = inlined_call_operand.hbm [shape: f32[2,4,256], index: 8, kind: output, shape index: {}]
  %s9 = sld [smem:[#allocation0]]
  $region81: #{tpu_custom_call.1} parent=0
    _
  %s11 = ssub.s32 1, %s9
  %s12 = scalar_select 0, %s11, %s9
  $region1: #{tpu_custom_call.1} parent=0
    #allocation10 [shape = 'u8[24576]{0}', space=vmem, size = 0x6000, scoped, tag = 'input window, operand 0']
    #allocation11 [shape = 's32[2]{0}', space=sflag, size = 0x8, scoped, tag = 'scoped memory for tpu_custom_call.1']
    #allocation12 [shape = 's32[2]{0}', space=sflag, size = 0x8, scoped, tag = 'scoped memory for tpu_custom_call.1']
    #allocation13 [shape = 'u8[12288]{0}', space=vmem, size = 0x3000, scoped, tag = 'input window, operand 2, single buffered']
    #allocation14 [shape = 's32[1]{0}', space=sflag, size = 0x4, scoped, tag = 'scoped memory for tpu_custom_call.1']
    #allocation15 [shape = 'u8[8192]{0}', space=vmem, size = 0x2000, scoped, tag = 'output window, operand 0']
    %13 = vsyncpa [#allocation11], 0
    %s14 = scalar_lea.sflag [#allocation11], 1
    %15 = vsyncpa %s14, 0
    %16 = vsyncpa [#allocation14], 0
    %17 = vsyncpa [#allocation12], 0
    %s18 = scalar_lea.sflag [#allocation12], 1
    %19 = vsyncpa %s18, 0
    loop: start=0, step=1, limit=6
    $region2: #{tpu_custom_call.1} parent=1 // loop_pre_header
      _
    $region3: #{tpu_custom_call.1} parent=1 // loop_header
      %s21 = sphi 0, %s25
      %p22 = scmp.ge.s32.totalorder %s21, 6
      %s28 = sphi 0, %s40
      %s29 = sphi 0, %s36
      %s30 = sphi 0, %s28
      %s31 = sphi 0, %s29
      %s32 = sphi 0, %s30
      %s33 = sphi 0, %s31
      %s43 = sphi 0, %s45
      %s46 = sphi 0, %s43
      %s47 = sphi 0, %s46
      %s63 = sphi 0, %s47
      %s67 = sphi 0, %s67
      %s69 = sphi 0, %s67
      %s70 = sphi 0, %s69
      %s84 = sphi 0, %s70
      %s88 = sphi 0, %s88
      %s90 = sphi 0, %s88
      %s91 = sphi 0, %s90
      %s105 = sphi 0, %s91
      %s109 = sphi 0, %s109
      %s111 = sphi 0, %s109
      %s112 = sphi 0, %s111
      %s126 = sphi 0, %s112
      %s130 = sphi 0, %s130
      %s132 = sphi 0, %s130
      %s133 = sphi 0, %s132
      %s147 = sphi 0, %s133
      %s151 = sphi 0, %s151
      %s153 = sphi 0, %s151
      %s154 = sphi 0, %s153
      %s168 = sphi 0, %s154
      %s172 = sphi 0, %s172
      %s174 = sphi 0, %s172
      %s175 = sphi 0, %s174
      %s189 = sphi 0, %s175
      %s193 = sphi 0, %s193
      %s195 = sphi 0, %s193
      %s196 = sphi 0, %s195
      %s210 = sphi 0, %s196
      %s216 = sphi 0, %s218
      %s219 = sphi 0, %s216
      %s220 = sphi 0, %s219
      %s236 = sphi 0, %s220
    $region4: #{tpu_custom_call.1} parent=1 // loop_header_branch
      %24 = sbr.rel (%p22) target = $region8
    $region5: #{tpu_custom_call.1} parent=1 // loop_body
      %s26 = ssub.s32 %s21, 1
      %s27 = ssub.s32 %s21, 2
      %s34 = sadd.s32 1, %s29
      %p35 = scmp.ge.s32.totalorder %s34, 2
      %s36 = scalar_select %p35, 0, %s34
      %s37 = sadd.s32 1, %s28
      %s38 = scalar_select %p35, %s37, %s28
      %p39 = scmp.ge.s32.totalorder %s38, 2
      %s40 = scalar_select %p39, 0, %s38
      %s41 = ssub.s32 %s28, %s40
      %p42 = scmp.eq.s32.totalorder %s41, 0
      %s44 = sadd.s32 %s43, 1
      %s45 = scalar_select %p42, %s43, %s44
      %p48 = pneg %p42
      %p49 = scmp.eq.s32.totalorder %s21, 3
      %p50 = por %p48, %p49
      %p51 = scmp.ne.s32.totalorder %s43, %s46
      %p52 = scmp.eq.s32.totalorder %s21, 0
      %p53 = por %p51, %p52
      %p54 = scmp.ne.s32.totalorder %s43, %s46
      %p55 = scmp.eq.s32.totalorder %s26, 3
      %p56 = por %p54, %p55
      %p57 = scmp.ne.s32.totalorder %s46, %s47
      %p58 = scmp.eq.s32.totalorder %s26, 0
      %p59 = por %p57, %p58
      %p60 = scmp.ne.s32.totalorder %s46, %s47
      %p61 = scmp.eq.s32.totalorder %s27, 3
      %p62 = por %p60, %p61
      %p64 = scmp.ne.s32.totalorder %s47, %s63
      %p65 = scmp.eq.s32.totalorder %s27, 0
      %p66 = por %p64, %p65
      %s68 = sadd.s32 %s67, 1
      %p71 = scmp.eq.s32.totalorder %s21, 3
      %p72 = scmp.ne.s32.totalorder %s67, %s69
      %p73 = scmp.eq.s32.totalorder %s21, 0
      %p74 = por %p72, %p73
      %p75 = scmp.ne.s32.totalorder %s67, %s69
      %p76 = scmp.eq.s32.totalorder %s26, 3
      %p77 = por %p75, %p76
      %p78 = scmp.ne.s32.totalorder %s69, %s70
      %p79 = scmp.eq.s32.totalorder %s26, 0
      %p80 = por %p78, %p79
      %p81 = scmp.ne.s32.totalorder %s69, %s70
      %p82 = scmp.eq.s32.totalorder %s27, 3
      %p83 = por %p81, %p82
      %p85 = scmp.ne.s32.totalorder %s70, %s84
      %p86 = scmp.eq.s32.totalorder %s27, 0
      %p87 = por %p85, %p86
      %s89 = sadd.s32 %s88, 1
      %p92 = scmp.eq.s32.totalorder %s21, 3
      %p93 = scmp.ne.s32.totalorder %s88, %s90
      %p94 = scmp.eq.s32.totalorder %s21, 0
      %p95 = por %p93, %p94
      %p96 = scmp.ne.s32.totalorder %s88, %s90
      %p97 = scmp.eq.s32.totalorder %s26, 3
      %p98 = por %p96, %p97
      %p99 = scmp.ne.s32.totalorder %s90, %s91
      %p100 = scmp.eq.s32.totalorder %s26, 0
      %p101 = por %p99, %p100
      %p102 = scmp.ne.s32.totalorder %s90, %s91
      %p103 = scmp.eq.s32.totalorder %s27, 3
      %p104 = por %p102, %p103
      %p106 = scmp.ne.s32.totalorder %s91, %s105
      %p107 = scmp.eq.s32.totalorder %s27, 0
      %p108 = por %p106, %p107
      %s110 = sadd.s32 %s109, 1
      %p113 = scmp.eq.s32.totalorder %s21, 3
      %p114 = scmp.ne.s32.totalorder %s109, %s111
      %p115 = scmp.eq.s32.totalorder %s21, 0
      %p116 = por %p114, %p115
      %p117 = scmp.ne.s32.totalorder %s109, %s111
      %p118 = scmp.eq.s32.totalorder %s26, 3
      %p119 = por %p117, %p118
      %p120 = scmp.ne.s32.totalorder %s111, %s112
      %p121 = scmp.eq.s32.totalorder %s26, 0
      %p122 = por %p120, %p121
      %p123 = scmp.ne.s32.totalorder %s111, %s112
      %p124 = scmp.eq.s32.totalorder %s27, 3
      %p125 = por %p123, %p124
      %p127 = scmp.ne.s32.totalorder %s112, %s126
      %p128 = scmp.eq.s32.totalorder %s27, 0
      %p129 = por %p127, %p128
      %s131 = sadd.s32 %s130, 1
      %p134 = scmp.eq.s32.totalorder %s21, 3
      %p135 = scmp.ne.s32.totalorder %s130, %s132
      %p136 = scmp.eq.s32.totalorder %s21, 0
      %p137 = por %p135, %p136
      %p138 = scmp.ne.s32.totalorder %s130, %s132
      %p139 = scmp.eq.s32.totalorder %s26, 3
      %p140 = por %p138, %p139
      %p141 = scmp.ne.s32.totalorder %s132, %s133
      %p142 = scmp.eq.s32.totalorder %s26, 0
      %p143 = por %p141, %p142
      %p144 = scmp.ne.s32.totalorder %s132, %s133
      %p145 = scmp.eq.s32.totalorder %s27, 3
      %p146 = por %p144, %p145
      %p148 = scmp.ne.s32.totalorder %s133, %s147
      %p149 = scmp.eq.s32.totalorder %s27, 0
      %p150 = por %p148, %p149
      %s152 = sadd.s32 %s151, 1
      %p155 = scmp.eq.s32.totalorder %s21, 3
      %p156 = scmp.ne.s32.totalorder %s151, %s153
      %p157 = scmp.eq.s32.totalorder %s21, 0
      %p158 = por %p156, %p157
      %p159 = scmp.ne.s32.totalorder %s151, %s153
      %p160 = scmp.eq.s32.totalorder %s26, 3
      %p161 = por %p159, %p160
      %p162 = scmp.ne.s32.totalorder %s153, %s154
      %p163 = scmp.eq.s32.totalorder %s26, 0
      %p164 = por %p162, %p163
      %p165 = scmp.ne.s32.totalorder %s153, %s154
      %p166 = scmp.eq.s32.totalorder %s27, 3
      %p167 = por %p165, %p166
      %p169 = scmp.ne.s32.totalorder %s154, %s168
      %p170 = scmp.eq.s32.totalorder %s27, 0
      %p171 = por %p169, %p170
      %s173 = sadd.s32 %s172, 1
      %p176 = scmp.eq.s32.totalorder %s21, 3
      %p177 = scmp.ne.s32.totalorder %s172, %s174
      %p178 = scmp.eq.s32.totalorder %s21, 0
      %p179 = por %p177, %p178
      %p180 = scmp.ne.s32.totalorder %s172, %s174
      %p181 = scmp.eq.s32.totalorder %s26, 3
      %p182 = por %p180, %p181
      %p183 = scmp.ne.s32.totalorder %s174, %s175
      %p184 = scmp.eq.s32.totalorder %s26, 0
      %p185 = por %p183, %p184
      %p186 = scmp.ne.s32.totalorder %s174, %s175
      %p187 = scmp.eq.s32.totalorder %s27, 3
      %p188 = por %p186, %p187
      %p190 = scmp.ne.s32.totalorder %s175, %s189
      %p191 = scmp.eq.s32.totalorder %s27, 0
      %p192 = por %p190, %p191
      %s194 = sadd.s32 %s193, 1
      %p197 = scmp.eq.s32.totalorder %s21, 3
      %p198 = scmp.ne.s32.totalorder %s193, %s195
      %p199 = scmp.eq.s32.totalorder %s21, 0
      %p200 = por %p198, %p199
      %p201 = scmp.ne.s32.totalorder %s193, %s195
      %p202 = scmp.eq.s32.totalorder %s26, 3
      %p203 = por %p201, %p202
      %p204 = scmp.ne.s32.totalorder %s195, %s196
      %p205 = scmp.eq.s32.totalorder %s26, 0
      %p206 = por %p204, %p205
      %p207 = scmp.ne.s32.totalorder %s195, %s196
      %p208 = scmp.eq.s32.totalorder %s27, 3
      %p209 = por %p207, %p208
      %p211 = scmp.ne.s32.totalorder %s196, %s210
      %p212 = scmp.eq.s32.totalorder %s27, 0
      %p213 = por %p211, %p212
      %s214 = ssub.s32 %s28, %s40
      %p215 = scmp.eq.s32.totalorder %s214, 0
      %s217 = sadd.s32 %s216, 1
      %s218 = scalar_select %p215, %s216, %s217
      %p221 = pneg %p215
      %p222 = scmp.eq.s32.totalorder %s21, 3
      %p223 = por %p221, %p222
      %p224 = scmp.ne.s32.totalorder %s216, %s219
      %p225 = scmp.eq.s32.totalorder %s21, 0
      %p226 = por %p224, %p225
      %p227 = scmp.ne.s32.totalorder %s216, %s219
      %p228 = scmp.eq.s32.totalorder %s26, 3
      %p229 = por %p227, %p228
      %p230 = scmp.ne.s32.totalorder %s219, %s220
      %p231 = scmp.eq.s32.totalorder %s26, 0
      %p232 = por %p230, %p231
      %p233 = scmp.ne.s32.totalorder %s219, %s220
      %p234 = scmp.eq.s32.totalorder %s27, 3
      %p235 = por %p233, %p234
      %p237 = scmp.ne.s32.totalorder %s220, %s236
      %p238 = scmp.eq.s32.totalorder %s27, 0
      %p239 = por %p237, %p238
      %p240 = scmp.le.s32.totalorder 1, %s21
      %p241 = scmp.lt.s32.totalorder %s21, 5
      %p242 = pnand %p240, %p241
      %p243 = pneg %p242
      // Predicated region
      $region9: #{tpu_custom_call.1} parent=5 // pred_check
        _
      $region10: #{tpu_custom_call.1} parent=5 // pred_check_branch
        %245 = sbr.rel (%p242) target = $region12
      $region11: #{tpu_custom_call.1} parent=5 // pred_region
        %s246 = ssub.s32 %s21, 1
        // Predicated region
        $region13: #{tpu_custom_call.1} parent=11 // pred_check
          %p247 = pneg %p80
        $region14: #{tpu_custom_call.1} parent=11 // pred_check_branch
          %249 = sbr.rel (%p247) target = $region16
        $region15: #{tpu_custom_call.1} parent=11 // pred_region
          _
        $region16: #{tpu_custom_call.1} parent=11 // pred_fallthru
          _
        // Predicated region
        $region17: #{tpu_custom_call.1} parent=11 // pred_check
          %p250 = pneg %p101
        $region18: #{tpu_custom_call.1} parent=11 // pred_check_branch
          %252 = sbr.rel (%p250) target = $region20
        $region19: #{tpu_custom_call.1} parent=11 // pred_region
          %s254 = ssub.s32 384, 384
          %255 = vsyncadd [#allocation14], %s254
          %s256 = sshll.u32 [#allocation13], 4
          %s257 = int_to_ptr.vmem [resolvable:$true] %s256
          %262 = dma.hbm_to_vmem [thread:$0]  %s2, 384, %s257, [#allocation14], 128, 128, 8
        $region20: #{tpu_custom_call.1} parent=11 // pred_fallthru
          _
        // Predicated region
        $region21: #{tpu_custom_call.1} parent=11 // pred_check
          %p263 = pneg %p122
        $region22: #{tpu_custom_call.1} parent=11 // pred_check_branch
          %265 = sbr.rel (%p263) target = $region24
        $region23: #{tpu_custom_call.1} parent=11 // pred_region
          _
        $region24: #{tpu_custom_call.1} parent=11 // pred_fallthru
          _
        // Predicated region
        $region25: #{tpu_custom_call.1} parent=11 // pred_check
          %p266 = pneg %p143
        $region26: #{tpu_custom_call.1} parent=11 // pred_check_branch
          %268 = sbr.rel (%p266) target = $region28
        $region27: #{tpu_custom_call.1} parent=11 // pred_region
          _
        $region28: #{tpu_custom_call.1} parent=11 // pred_fallthru
          _
        // Predicated region
        $region29: #{tpu_custom_call.1} parent=11 // pred_check
          %p269 = pneg %p164
        $region30: #{tpu_custom_call.1} parent=11 // pred_check_branch
          %271 = sbr.rel (%p269) target = $region32
        $region31: #{tpu_custom_call.1} parent=11 // pred_region
          _
        $region32: #{tpu_custom_call.1} parent=11 // pred_fallthru
          _
        // Predicated region
        $region33: #{tpu_custom_call.1} parent=11 // pred_check
          %p272 = pneg %p185
        $region34: #{tpu_custom_call.1} parent=11 // pred_check_branch
          %274 = sbr.rel (%p272) target = $region36
        $region35: #{tpu_custom_call.1} parent=11 // pred_region
          _
        $region36: #{tpu_custom_call.1} parent=11 // pred_fallthru
          _
        // Predicated region
        $region37: #{tpu_custom_call.1} parent=11 // pred_check
          %p275 = pneg %p206
        $region38: #{tpu_custom_call.1} parent=11 // pred_check_branch
          %277 = sbr.rel (%p275) target = $region40
        $region39: #{tpu_custom_call.1} parent=11 // pred_region
          _
        $region40: #{tpu_custom_call.1} parent=11 // pred_fallthru
          _
      $region12: #{tpu_custom_call.1} parent=5 // pred_fallthru
        _
      %p278 = scmp.lt.s32.totalorder %s21, 4
      // Predicated region
      $region41: #{tpu_custom_call.1} parent=5 // pred_check
        %p279 = pneg %p278
      $region42: #{tpu_custom_call.1} parent=5 // pred_check_branch
        %281 = sbr.rel (%p279) target = $region44
      $region43: #{tpu_custom_call.1} parent=5 // pred_region
        // Predicated region
        $region45: #{tpu_custom_call.1} parent=43 // pred_check
          %p282 = pneg %p53
        $region46: #{tpu_custom_call.1} parent=43 // pred_check_branch
          %284 = sbr.rel (%p282) target = $region48
        $region47: #{tpu_custom_call.1} parent=43 // pred_region
          %s285 = sand.u32 %s43, 1
          %s286 = scalar_lea.sflag [#allocation11], %s285
          %s287 = sand.u32 %s43, 1
          %s288 = smul.addr %s287, 24
          %s289 = scalar_lea.vmem [#allocation10], %s288
          %s291 = ssub.s32 384, 384
          %292 = vsyncadd %s286, %s291
          %s293 = smul.addr %s28, 3
          %s294 = smul.addr %s293, 128
          %s295 = scalar_lea.hbm %s0, %s294
          %s297 = sshll.u32 %s289, 4
          %s298 = int_to_ptr.vmem [resolvable:$true] %s297
          %300 = dma.hbm_to_vmem [thread:$0]  %s295, 384, %s298, %s286
        $region48: #{tpu_custom_call.1} parent=43 // pred_fallthru
          _
      $region44: #{tpu_custom_call.1} parent=5 // pred_fallthru
        _
      %p301 = scmp.le.s32.totalorder 1, %s21
      %p302 = scmp.lt.s32.totalorder %s21, 5
      %p303 = pnand %p301, %p302
      %p304 = pneg %p303
      // Predicated region
      $region49: #{tpu_custom_call.1} parent=5 // pred_check
        _
      $region50: #{tpu_custom_call.1} parent=5 // pred_check_branch
        %306 = sbr.rel (%p303) target = $region52
      $region51: #{tpu_custom_call.1} parent=5 // pred_region
        %s307 = ssub.s32 %s21, 1
        %s308 = sand.u32 %s46, 1
        %s309 = scalar_lea.sflag [#allocation11], %s308
        %s310 = sand.u32 %s46, 1
        %s311 = smul.addr %s310, 24
        %s312 = scalar_lea.vmem [#allocation10], %s311
        // Predicated region
        $region53: #{tpu_custom_call.1} parent=51 // pred_check
          %p313 = pneg %p59
        $region54: #{tpu_custom_call.1} parent=51 // pred_check_branch
          %315 = sbr.rel (%p313) target = $region56
        $region55: #{tpu_custom_call.1} parent=51 // pred_region
          %316 = dma.done %s309, 384
        $region56: #{tpu_custom_call.1} parent=51 // pred_fallthru
          _
        // Predicated region
        $region57: #{tpu_custom_call.1} parent=51 // pred_check
          %p317 = pneg %p101
        $region58: #{tpu_custom_call.1} parent=51 // pred_check_branch
          %319 = sbr.rel (%p317) target = $region60
        $region59: #{tpu_custom_call.1} parent=51 // pred_region
          %320 = dma.done [#allocation14], 384
        $region60: #{tpu_custom_call.1} parent=51 // pred_fallthru
          _
        %s321 = sand.u32 %s46, 1
        %s322 = scalar_lea.sflag [#allocation11], %s321
        %s323 = sand.u32 %s46, 1
        %s324 = smul.addr %s323, 24
        %s325 = scalar_lea.vmem [#allocation10], %s324
        %p326 = pneg %p59
        %p327 = pneg %p56
        %p328 = pneg %p80
        %p329 = pneg %p77
        %p330 = pneg %p101
        %p331 = pneg %p98
        %p332 = pneg %p122
        %p333 = pneg %p119
        %p334 = pneg %p143
        %p335 = pneg %p140
        %p336 = pneg %p164
        %p337 = pneg %p161
        %p338 = pneg %p185
        %p339 = pneg %p182
        %p340 = pneg %p206
        %p341 = pneg %p203
        %p342 = pneg %p232
        %p343 = pneg %p229
        %s344 = sand.u32 %s219, 1
        %s345 = scalar_lea.sflag [#allocation12], %s344
        %s346 = sand.u32 %s219, 1
        %s347 = smul.addr %s346, 8
        %s348 = scalar_lea.vmem [#allocation15], %s347
        %p349 = scmp.eq.s32.totalorder %s31, 0
        // Predicated region
        $region61: #{tpu_custom_call.1} parent=51 // pred_check
          %p350 = pneg %p349
        $region62: #{tpu_custom_call.1} parent=51 // pred_check_branch
          %352 = sbr.rel (%p350) target = $region64
        $region63: #{tpu_custom_call.1} parent=51 // pred_region
          %v353 = vld [vmem:[%s1] ss:$2 sm:$0x3]
          %s354 = scalar_lea.vmem %s1, 1
          %v355 = vld [vmem:[%s354] ss:$2 sm:$0x3]
          %v356 = vld [vmem:[%s312] sm:$0xff]
          %v357 = vld [vmem:[%s312 + $0x8] sm:$0xff]
          %v359 = vlaneseq
          %v360 = vshrl.u32 %v359, 7
          %v361 = vsub.s32 0, %v360
          %v362 = vrot.slane %v353, %v361
          %v363 = vlaneseq
          %v364 = vshrl.u32 %v363, 7
          %v365 = vsub.s32 1, %v364
          %v366 = vrot.slane %v353, %v365
          %v369 = vmul.f32 %v356, %v362
          %v370 = vmul.f32 %v357, %v366
          %371 = vst [vmem:[#allocation2] sm:$0xff] %v369
          %372 = vst [vmem:[#allocation2 + $0x8] sm:$0xff] %v370
          %v373 = vld [vmem:[%s312] sm:$0xff]
          %v374 = vld [vmem:[%s312 + $0x8] sm:$0xff]
          %v375 = vld [vmem:[%s312 + $0x10] sm:$0xff]
          %379 = vrot.lane.b32.xlu0 %v373, 127
          %v380 = vpop.permute.xlu0 %379
          %381 = vrot.lane.b32.xlu0 %v374, 127
          %v382 = vpop.permute.xlu0 %381
          %383 = vrot.lane.b32.xlu0 %v375, 127
          %v384 = vpop.permute.xlu0 %383
          %vm385 = vcmask 1039360
          %v386 = vsel %vm385, %v380, %v382
          %v387 = vsel %vm385, %v382, %v384
          %390 = vst [vmem:[#allocation2 + $0x10] sm:$0xff] %v386
          %391 = vst [vmem:[#allocation2 + $0x18] sm:$0xff] %v387
          %v392 = vld [vmem:[%s312] sm:$0xff]
          %v393 = vld [vmem:[%s312 + $0x8] sm:$0xff]
          %v394 = vld [vmem:[%s312 + $0x10] sm:$0xff]
          %v396 = vlaneseq
          %v397 = vshrl.u32 %v396, 7
          %v398 = vsub.s32 0, %v397
          %v399 = vrot.slane %v355, %v398
          %v400 = vlaneseq
          %v401 = vshrl.u32 %v400, 7
          %v402 = vsub.s32 1, %v401
          %v403 = vrot.slane %v355, %v402
          %404 = vrot.lane.b32.xlu0 %v399, 2
          %v405 = vpop.permute.xlu0 %404
          %406 = vrot.lane.b32.xlu0 %v403, 2
          %v407 = vpop.permute.xlu0 %406
          %vm408 = vcmask 15360
          %v409 = vsel %vm408, %v405, %v407
          %v413 = vmul.f32 %v392, %v405
          %v414 = vmul.f32 %v393, %v409
          %v415 = vmul.f32 %v394, %v407
          %419 = vrot.lane.b32.xlu0 %v413, 126
          %v420 = vpop.permute.xlu0 %419
          %421 = vrot.lane.b32.xlu0 %v414, 126
          %v422 = vpop.permute.xlu0 %421
          %423 = vrot.lane.b32.xlu0 %v415, 126
          %v424 = vpop.permute.xlu0 %423
          %vm425 = vcmask 1031168
          %v426 = vsel %vm425, %v420, %v422
          %v427 = vsel %vm425, %v422, %v424
          %430 = vst [vmem:[#allocation2 + $0x20] sm:$0xff] %v426
          %431 = vst [vmem:[#allocation2 + $0x28] sm:$0xff] %v427
          %v432 = vld [vmem:[%s312] sm:$0xff]
          %v433 = vld [vmem:[%s312 + $0x8] sm:$0xff]
          %v434 = vld [vmem:[%s312 + $0x10] sm:$0xff]
          %435 = vrot.lane.b32.xlu0 %v362, 16
          %v436 = vpop.permute.xlu0 %435
          %437 = vrot.lane.b32.xlu0 %v366, 16
          %v438 = vpop.permute.xlu0 %437
          %vm439 = vcmask 130048
          %v440 = vsel %vm439, %v436, %v438
          %v444 = vmul.f32 %v432, %v436
          %v445 = vmul.f32 %v433, %v440
          %v446 = vmul.f32 %v434, %v438
          %450 = vrot.lane.b32.xlu0 %v444, 112
          %v451 = vpop.permute.xlu0 %450
          %452 = vrot.lane.b32.xlu0 %v445, 112
          %v453 = vpop.permute.xlu0 %452
          %454 = vrot.lane.b32.xlu0 %v446, 112
          %v455 = vpop.permute.xlu0 %454
          %vm456 = vcmask 916480
          %v457 = vsel %vm456, %v451, %v453
          %v458 = vsel %vm456, %v453, %v455
          %461 = vst [vmem:[#allocation2 + $0x30] sm:$0xff] %v457
          %462 = vst [vmem:[#allocation2 + $0x38] sm:$0xff] %v458
          %v463 = vld [vmem:[%s312] sm:$0xff]
          %v464 = vld [vmem:[%s312 + $0x8] sm:$0xff]
          %v465 = vld [vmem:[%s312 + $0x10] sm:$0xff]
          %469 = vrot.lane.b32.xlu0 %v463, 111
          %v470 = vpop.permute.xlu0 %469
          %471 = vrot.lane.b32.xlu0 %v464, 111
          %v472 = vpop.permute.xlu0 %471
          %473 = vrot.lane.b32.xlu0 %v465, 111
          %v474 = vpop.permute.xlu0 %473
          %vm475 = vcmask 908288
          %v476 = vsel %vm475, %v470, %v472
          %v477 = vsel %vm475, %v472, %v474
          %480 = vst [vmem:[#allocation2 + $0x40] sm:$0xff] %v476
          %481 = vst [vmem:[#allocation2 + $0x48] sm:$0xff] %v477
          %v482 = vld [vmem:[%s312] sm:$0xff]
          %v483 = vld [vmem:[%s312 + $0x8] sm:$0xff]
          %v484 = vld [vmem:[%s312 + $0x10] sm:$0xff]
          %485 = vrot.lane.b32.xlu0 %v399, 18
          %v486 = vpop.permute.xlu0 %485
          %487 = vrot.lane.b32.xlu0 %v403, 18
          %v488 = vpop.permute.xlu0 %487
          %vm489 = vcmask 146432
          %v490 = vsel %vm489, %v486, %v488
          %v494 = vmul.f32 %v482, %v486
          %v495 = vmul.f32 %v483, %v490
          %v496 = vmul.f32 %v484, %v488
          %500 = vrot.lane.b32.xlu0 %v494, 110
          %v501 = vpop.permute.xlu0 %500
          %502 = vrot.lane.b32.xlu0 %v495, 110
          %v503 = vpop.permute.xlu0 %502
          %504 = vrot.lane.b32.xlu0 %v496, 110
          %v505 = vpop.permute.xlu0 %504
          %vm506 = vcmask 900096
          %v507 = vsel %vm506, %v501, %v503
          %v508 = vsel %vm506, %v503, %v505
          %511 = vst [vmem:[#allocation2 + $0x50] sm:$0xff] %v507
          %512 = vst [vmem:[#allocation2 + $0x58] sm:$0xff] %v508
          %v513 = vld [vmem:[%s312] sm:$0xff]
          %v514 = vld [vmem:[%s312 + $0x8] sm:$0xff]
          %v515 = vld [vmem:[%s312 + $0x10] sm:$0xff]
          %516 = vrot.lane.b32.xlu0 %v362, 32
          %v517 = vpop.permute.xlu0 %516
          %518 = vrot.lane.b32.xlu0 %v366, 32
          %v519 = vpop.permute.xlu0 %518
          %vm520 = vcmask 261120
          %v521 = vsel %vm520, %v517, %v519
          %v525 = vmul.f32 %v513, %v517
          %v526 = vmul.f32 %v514, %v521
          %v527 = vmul.f32 %v515, %v519
          %531 = vrot.lane.b32.xlu0 %v525, 96
          %v532 = vpop.permute.xlu0 %531
          %533 = vrot.lane.b32.xlu0 %v526, 96
          %v534 = vpop.permute.xlu0 %533
          %535 = vrot.lane.b32.xlu0 %v527, 96
          %v536 = vpop.permute.xlu0 %535
          %vm537 = vcmask 785408
          %v538 = vsel %vm537, %v532, %v534
          %v539 = vsel %vm537, %v534, %v536
          %542 = vst [vmem:[#allocation2 + $0x60] sm:$0xff] %v538
          %543 = vst [vmem:[#allocation2 + $0x68] sm:$0xff] %v539
          %v544 = vld [vmem:[%s312] sm:$0xff]
          %v545 = vld [vmem:[%s312 + $0x8] sm:$0xff]
          %v546 = vld [vmem:[%s312 + $0x10] sm:$0xff]
          %550 = vrot.lane.b32.xlu0 %v544, 95
          %v551 = vpop.permute.xlu0 %550
          %552 = vrot.lane.b32.xlu0 %v545, 95
          %v553 = vpop.permute.xlu0 %552
          %554 = vrot.lane.b32.xlu0 %v546, 95
          %v555 = vpop.permute.xlu0 %554
          %vm556 = vcmask 777216
          %v557 = vsel %vm556, %v551, %v553
          %v558 = vsel %vm556, %v553, %v555
          %561 = vst [vmem:[#allocation2 + $0x70] sm:$0xff] %v557
          %562 = vst [vmem:[#allocation2 + $0x78] sm:$0xff] %v558
          %v563 = vld [vmem:[%s312] sm:$0xff]
          %v564 = vld [vmem:[%s312 + $0x8] sm:$0xff]
          %v565 = vld [vmem:[%s312 + $0x10] sm:$0xff]
          %566 = vrot.lane.b32.xlu0 %v399, 34
          %v567 = vpop.permute.xlu0 %566
          %568 = vrot.lane.b32.xlu0 %v403, 34
          %v569 = vpop.permute.xlu0 %568
          %vm570 = vcmask 277504
          %v571 = vsel %vm570, %v567, %v569
          %v575 = vmul.f32 %v563, %v567
          %v576 = vmul.f32 %v564, %v571
          %v577 = vmul.f32 %v565, %v569
          %581 = vrot.lane.b32.xlu0 %v575, 94
          %v582 = vpop.permute.xlu0 %581
          %583 = vrot.lane.b32.xlu0 %v576, 94
          %v584 = vpop.permute.xlu0 %583
          %585 = vrot.lane.b32.xlu0 %v577, 94
          %v586 = vpop.permute.xlu0 %585
          %vm587 = vcmask 769024
          %v588 = vsel %vm587, %v582, %v584
          %v589 = vsel %vm587, %v584, %v586
          %592 = vst [vmem:[#allocation2 + $0x80] sm:$0xff] %v588
          %593 = vst [vmem:[#allocation2 + $0x88] sm:$0xff] %v589
          %v594 = vld [vmem:[#allocation13] sm:$0xff]
          %v595 = vld [vmem:[#allocation13 + $0x8] sm:$0xff]
          %v596 = vld [vmem:[#allocation13 + $0x10] sm:$0xff]
          %v597 = vld [vmem:[#allocation2] sm:$0xff]
          %v598 = vld [vmem:[#allocation2 + $0x8] sm:$0xff]
          %v599 = vld [vmem:[#allocation2 + $0x10] sm:$0xff]
          %v600 = vld [vmem:[#allocation2 + $0x18] sm:$0xff]
          %v601 = vld [vmem:[#allocation2 + $0x20] sm:$0xff]
          %v602 = vld [vmem:[#allocation2 + $0x28] sm:$0xff]
          %v603 = vld [vmem:[#allocation2 + $0x30] sm:$0xff]
          %v604 = vld [vmem:[#allocation2 + $0x38] sm:$0xff]
          %v605 = vld [vmem:[#allocation2 + $0x40] sm:$0xff]
          %v606 = vld [vmem:[#allocation2 + $0x48] sm:$0xff]
          %v607 = vld [vmem:[#allocation2 + $0x50] sm:$0xff]
          %v608 = vld [vmem:[#allocation2 + $0x58] sm:$0xff]
          %v609 = vld [vmem:[#allocation2 + $0x60] sm:$0xff]
          %v610 = vld [vmem:[#allocation2 + $0x68] sm:$0xff]
          %v611 = vld [vmem:[#allocation2 + $0x70] sm:$0xff]
          %v612 = vld [vmem:[#allocation2 + $0x78] sm:$0xff]
          %v613 = vld [vmem:[#allocation2 + $0x80] sm:$0xff]
          %v614 = vld [vmem:[#allocation2 + $0x88] sm:$0xff]
          %vm615 = vcmask 588800
          %v617 = vsel %vm615, %v594, 0
          %v620 = vsel %vm615, %v595, 0
          %v623 = vsel %vm615, %v596, 0
          %625 = vmatprep.subr.mxu0 %v598
          %626 = vmatpush1.msra.mxu0 %v597
          %627 = vmatprep.subr.mxu0 %v600
          %628 = vmatpush1.msra.mxu0 %v599
          %629 = vmatprep.subr.mxu0 %v602
          %630 = vmatpush1.msra.mxu0 %v601
          %631 = vmatprep.subr.mxu0 %v604
          %632 = vmatpush1.msra.mxu0 %v603
          %633 = vmatprep.subr.mxu0 %v606
          %634 = vmatpush1.msra.mxu0 %v605
          %635 = vmatprep.subr.mxu0 %v608
          %636 = vmatpush1.msra.mxu0 %v607
          %637 = vmatprep.subr.mxu0 %v610
          %638 = vmatpush1.msra.mxu0 %v609
          %639 = vmatprep.subr.mxu0 %v612
          %640 = vmatpush1.msra.mxu0 %v611
          %641 = vmatprep.subr.mxu0 %v614
          %642 = vmatpush1.msra.mxu0 %v613
          %643 = vmatprep.subr.mxu0 0.0
          %644 = vmatpush1.msra.mxu0 0.0
          %645 = vmatprep.subr.mxu0 0.0
          %646 = vmatpush1.msra.mxu0 0.0
          %647 = vmatprep.subr.mxu0 0.0
          %648 = vmatpush1.msra.mxu0 0.0
          %649 = vmatprep.subr.mxu0 0.0
          %650 = vmatpush1.msra.mxu0 0.0
          %651 = vmatprep.subr.mxu0 0.0
          %652 = vmatpush1.msra.mxu0 0.0
          %653 = vmatprep.subr.mxu0 0.0
          %654 = vmatpush1.msra.mxu0 0.0
          %655 = vmatprep.subr.mxu0 0.0
          %656 = vmatpush1.msra.mxu0 0.0
          %657 = vmatprep.subr.mxu0 0.0
          %658 = vmatpush1.msra.mxu0 0.0
          %659 = vmatprep.subr.mxu0 0.0
          %660 = vmatpush1.msra.mxu0 0.0
          %661 = vmatprep.subr.mxu0 0.0
          %662 = vmatpush1.msra.mxu0 0.0
          %663 = vmatprep.subr.mxu0 0.0
          %664 = vmatpush1.msra.mxu0 0.0
          %665 = vmatprep.subr.mxu0 0.0
          %666 = vmatpush1.msra.mxu0 0.0
          %667 = vmatprep.subr.mxu0 0.0
          %668 = vmatpush1.msra.mxu0 0.0
          %669 = vmatprep.subr.mxu0 0.0
          %670 = vmatpush1.msra.mxu0 0.0
          %671 = vmatprep.subr.mxu0 0.0
          %672 = vmatpush1.msra.mxu0 0.0
          %673 = vmatprep.subr.mxu0 0.0
          %674 = vmatpush1.msra.mxu0 0.0
          %675 = vmatprep.subr.mxu0 0.0
          %676 = vmatpush1.msra.mxu0 0.0
          %677 = vmatprep.subr.mxu0 0.0
          %678 = vmatpush1.msra.mxu0 0.0
          %679 = vmatprep.subr.mxu0 0.0
          %680 = vmatpush1.msra.mxu0 0.0
          %681 = vmatprep.subr.mxu0 0.0
          %682 = vmatpush1.msra.mxu0 0.0
          %683 = vmatprep.subr.mxu0 0.0
          %684 = vmatpush1.msra.mxu0 0.0
          %685 = vmatprep.subr.mxu0 0.0
          %686 = vmatpush1.msra.mxu0 0.0
          %687 = vmatprep.subr.mxu0 0.0
          %688 = vmatpush1.msra.mxu0 0.0
          %689 = vmatprep.mubr.f32.mxu0 0.0
          %690 = vmatmul.mubr.f32.gmra.mrb[0].mxu0 %v617
          %v691 = vpop.f32.mrb[0].mxu0
          %v692 = vadd.f32 0.0, %v691
          %v693 = vpop.f32.mrb[0].mxu0
          %v694 = vadd.f32 0.0, %v693
          %695 = vmatprep.mubr.f32.mxu0 0.0
          %696 = vmatmul.mubr.f32.gmra.mrb[0].mxu0 %v620
          %v697 = vpop.f32.mrb[0].mxu0
          %v698 = vadd.f32 0.0, %v697
          %v699 = vpop.f32.mrb[0].mxu0
          %v700 = vadd.f32 0.0, %v699
          %701 = vmatprep.mubr.f32.mxu0 0.0
          %702 = vmatmul.mubr.f32.gmra.mrb[0].mxu0 %v623
          %v703 = vpop.f32.mrb[0].mxu0
          %v704 = vadd.f32 0.0, %v703
          %v705 = vpop.f32.mrb[0].mxu0
          %v706 = vadd.f32 0.0, %v705
          %707 = vdwg.mxu0
          %708 = vst [vmem:[#allocation3] sm:$0xff] %v692
          %709 = vst [vmem:[#allocation3 + $0x8] sm:$0xff] %v694
          %710 = vst [vmem:[#allocation4] sm:$0xff] %v698
          %711 = vst [vmem:[#allocation4 + $0x8] sm:$0xff] %v700
          %712 = vst [vmem:[#allocation5] sm:$0xff] %v704
          %713 = vst [vmem:[#allocation5 + $0x8] sm:$0xff] %v706
          %v714 = vlaneseq
          %vm715 = vcmp.ge.s32.totalorder %v714, 0
          %vm716 = vcmp.lt.s32.totalorder %v714, 256
          %vm717 = vmand %vm715, %vm716
          %718 = vst.msk [vmem:[#allocation6] sm:$0x3] %vm717, -inf
          %719 = vst.msk [vmem:[#allocation7] sm:$0x3] %vm717, 0.0
          %720 = vst [vmem:[#allocation8] sm:$0xff] 0.0
          %721 = vst [vmem:[#allocation8 + $0x8] sm:$0xff] 0.0
          %vm722 = vcmask 138240
          %723 = vst.msk [vmem:[#allocation9] sm:$0xff] %vm722, 0.0
          %vm724 = vcmask 277640
          %725 = vst.msk [vmem:[#allocation9 + $0x10] sm:$0xff] %vm724, 0.0
        $region64: #{tpu_custom_call.1} parent=51 // pred_fallthru
          _
        %s726 = smul.u32 %s31, 128
        %v727 = vld [vmem:[#allocation3] sm:$0xff]
        %v728 = vld [vmem:[#allocation3 + $0x8] sm:$0xff]
        %s729 = sshra.s32 %s726, 7
        %s730 = sand.u32 %s726, 127
        %s731 = smul.addr %s729, 8
        %s732 = scalar_lea.vmem [#allocation4], %s731
        %v733 = vld [vmem:[%s732] sm:$0xff]
        %s734 = smul.addr %s729, 8
        %s735 = scalar_lea.vmem [#allocation5], %s734
        %v736 = vld [vmem:[%s735] sm:$0xff]
        %737 = vxpose.xlu0.b32.start [1/16] %v733, 128
        %738 = vxpose.xlu0.b32.cont [2/16] 0.0, 128
        %739 = vxpose.xlu0.b32.cont [3/16] 0.0, 128
        %740 = vxpose.xlu0.b32.cont [4/16] 0.0, 128
        %741 = vxpose.xlu0.b32.cont [5/16] 0.0, 128
        %742 = vxpose.xlu0.b32.cont [6/16] 0.0, 128
        %743 = vxpose.xlu0.b32.cont [7/16] 0.0, 128
        %744 = vxpose.xlu0.b32.cont [8/16] 0.0, 128
        %745 = vxpose.xlu0.b32.cont [9/16] 0.0, 128
        %746 = vxpose.xlu0.b32.cont [10/16] 0.0, 128
        %747 = vxpose.xlu0.b32.cont [11/16] 0.0, 128
        %748 = vxpose.xlu0.b32.cont [12/16] 0.0, 128
        %749 = vxpose.xlu0.b32.cont [13/16] 0.0, 128
        %750 = vxpose.xlu0.b32.cont [14/16] 0.0, 128
        %751 = vxpose.xlu0.b32.cont [15/16] 0.0, 128
        %752 = vxpose.xlu0.b32.end [16/16] 0.0, 128
        %v753 = vpop.trf.xlu0
        %v754 = vpop.trf.xlu0
        %v755 = vpop.trf.xlu0
        %v756 = vpop.trf.xlu0
        %v757 = vpop.trf.xlu0
        %v758 = vpop.trf.xlu0
        %v759 = vpop.trf.xlu0
        %v760 = vpop.trf.xlu0
        %v761 = vpop.trf.xlu0
        %v762 = vpop.trf.xlu0
        %v763 = vpop.trf.xlu0
        %v764 = vpop.trf.xlu0
        %v765 = vpop.trf.xlu0
        %v766 = vpop.trf.xlu0
        %v767 = vpop.trf.xlu0
        %v768 = vpop.trf.xlu0
        %vm769 = vcmask 64512
        %v771 = vsel %vm769, %v753, 0
        %v774 = vsel %vm769, %v754, 0
        %v777 = vsel %vm769, %v755, 0
        %v780 = vsel %vm769, %v756, 0
        %v783 = vsel %vm769, %v757, 0
        %v786 = vsel %vm769, %v758, 0
        %v789 = vsel %vm769, %v759, 0
        %v792 = vsel %vm769, %v760, 0
        %v795 = vsel %vm769, %v761, 0
        %v798 = vsel %vm769, %v762, 0
        %v801 = vsel %vm769, %v763, 0
        %v804 = vsel %vm769, %v764, 0
        %v807 = vsel %vm769, %v765, 0
        %v810 = vsel %vm769, %v766, 0
        %v813 = vsel %vm769, %v767, 0
        %v816 = vsel %vm769, %v768, 0
        %818 = vmatprep.subr.mxu0 %v728
        %819 = vmatpush1.msra.mxu0 %v727
        %820 = vmatprep.subr.mxu0 0.0
        %821 = vmatpush1.msra.mxu0 0.0
        %822 = vmatprep.subr.mxu0 0.0
        %823 = vmatpush1.msra.mxu0 0.0
        %824 = vmatprep.subr.mxu0 0.0
        %825 = vmatpush1.msra.mxu0 0.0
        %826 = vmatprep.subr.mxu0 0.0
        %827 = vmatpush1.msra.mxu0 0.0
        %828 = vmatprep.subr.mxu0 0.0
        %829 = vmatpush1.msra.mxu0 0.0
        %830 = vmatprep.subr.mxu0 0.0
        %831 = vmatpush1.msra.mxu0 0.0
        %832 = vmatprep.subr.mxu0 0.0
        %833 = vmatpush1.msra.mxu0 0.0
        %834 = vmatprep.subr.mxu0 0.0
        %835 = vmatpush1.msra.mxu0 0.0
        %836 = vmatprep.subr.mxu0 0.0
        %837 = vmatpush1.msra.mxu0 0.0
        %838 = vmatprep.subr.mxu0 0.0
        %839 = vmatpush1.msra.mxu0 0.0
        %840 = vmatprep.subr.mxu0 0.0
        %841 = vmatpush1.msra.mxu0 0.0
        %842 = vmatprep.subr.mxu0 0.0
        %843 = vmatpush1.msra.mxu0 0.0
        %844 = vmatprep.subr.mxu0 0.0
        %845 = vmatpush1.msra.mxu0 0.0
        %846 = vmatprep.subr.mxu0 0.0
        %847 = vmatpush1.msra.mxu0 0.0
        %848 = vmatprep.subr.mxu0 0.0
        %849 = vmatpush1.msra.mxu0 0.0
        %850 = vmatprep.subr.mxu0 0.0
        %851 = vmatpush1.msra.mxu0 0.0
        %852 = vmatprep.subr.mxu0 0.0
        %853 = vmatpush1.msra.mxu0 0.0
        %854 = vmatprep.subr.mxu0 0.0
        %855 = vmatpush1.msra.mxu0 0.0
        %856 = vmatprep.subr.mxu0 0.0
        %857 = vmatpush1.msra.mxu0 0.0
        %858 = vmatprep.subr.mxu0 0.0
        %859 = vmatpush1.msra.mxu0 0.0
        %860 = vmatprep.subr.mxu0 0.0
        %861 = vmatpush1.msra.mxu0 0.0
        %862 = vmatprep.subr.mxu0 0.0
        %863 = vmatpush1.msra.mxu0 0.0
        %864 = vmatprep.subr.mxu0 0.0
        %865 = vmatpush1.msra.mxu0 0.0
        %866 = vmatprep.subr.mxu0 0.0
        %867 = vmatpush1.msra.mxu0 0.0
        %868 = vmatprep.subr.mxu0 0.0
        %869 = vmatpush1.msra.mxu0 0.0
        %870 = vmatprep.subr.mxu0 0.0
        %871 = vmatpush1.msra.mxu0 0.0
        %872 = vmatprep.subr.mxu0 0.0
        %873 = vmatpush1.msra.mxu0 0.0
        %874 = vmatprep.subr.mxu0 0.0
        %875 = vmatpush1.msra.mxu0 0.0
        %876 = vmatprep.subr.mxu0 0.0
        %877 = vmatpush1.msra.mxu0 0.0
        %878 = vmatprep.subr.mxu0 0.0
        %879 = vmatpush1.msra.mxu0 0.0
        %880 = vmatprep.subr.mxu0 0.0
        %881 = vmatpush1.msra.mxu0 0.0
        %882 = vmatprep.mubr.f32.mxu0 0.0
        %883 = vmatmul.mubr.f32.gmra.mrb[0].mxu0 %v771
        %v884 = vpop.f32.mrb[0].mxu0
        %v885 = vadd.f32 0.0, %v884
        %v886 = vpop.f32.mrb[0].mxu0
        %v887 = vadd.f32 0.0, %v886
        %888 = vmatprep.mubr.f32.mxu0 0.0
        %889 = vmatmul.mubr.f32.gmra.mrb[0].mxu0 %v774
        %v890 = vpop.f32.mrb[0].mxu0
        %v891 = vadd.f32 0.0, %v890
        %v892 = vpop.f32.mrb[0].mxu0
        %v893 = vadd.f32 0.0, %v892
        %894 = vmatprep.mubr.f32.mxu0 0.0
        %895 = vmatmul.mubr.f32.gmra.mrb[0].mxu0 %v777
        %v896 = vpop.f32.mrb[0].mxu0
        %v897 = vadd.f32 0.0, %v896
        %v898 = vpop.f32.mrb[0].mxu0
        %v899 = vadd.f32 0.0, %v898
        %900 = vmatprep.mubr.f32.mxu0 0.0
        %901 = vmatmul.mubr.f32.gmra.mrb[0].mxu0 %v780
        %v902 = vpop.f32.mrb[0].mxu0
        %v903 = vadd.f32 0.0, %v902
        %v904 = vpop.f32.mrb[0].mxu0
        %v905 = vadd.f32 0.0, %v904
        %906 = vmatprep.mubr.f32.mxu0 0.0
        %907 = vmatmul.mubr.f32.gmra.mrb[0].mxu0 %v783
        %v908 = vpop.f32.mrb[0].mxu0
        %v909 = vadd.f32 0.0, %v908
        %v910 = vpop.f32.mrb[0].mxu0
        %v911 = vadd.f32 0.0, %v910
        %912 = vmatprep.mubr.f32.mxu0 0.0
        %913 = vmatmul.mubr.f32.gmra.mrb[0].mxu0 %v786
        %v914 = vpop.f32.mrb[0].mxu0
        %v915 = vadd.f32 0.0, %v914
        %v916 = vpop.f32.mrb[0].mxu0
        %v917 = vadd.f32 0.0, %v916
        %918 = vmatprep.mubr.f32.mxu0 0.0
        %919 = vmatmul.mubr.f32.gmra.mrb[0].mxu0 %v789
        %v920 = vpop.f32.mrb[0].mxu0
        %v921 = vadd.f32 0.0, %v920
        %v922 = vpop.f32.mrb[0].mxu0
        %v923 = vadd.f32 0.0, %v922
        %924 = vmatprep.mubr.f32.mxu0 0.0
        %925 = vmatmul.mubr.f32.gmra.mrb[0].mxu0 %v792
        %v926 = vpop.f32.mrb[0].mxu0
        %v927 = vadd.f32 0.0, %v926
        %v928 = vpop.f32.mrb[0].mxu0
        %v929 = vadd.f32 0.0, %v928
        %930 = vmatprep.mubr.f32.mxu0 0.0
        %931 = vmatmul.mubr.f32.gmra.mrb[0].mxu0 %v795
        %v932 = vpop.f32.mrb[0].mxu0
        %v933 = vadd.f32 0.0, %v932
        %v934 = vpop.f32.mrb[0].mxu0
        %v935 = vadd.f32 0.0, %v934
        %936 = vmatprep.mubr.f32.mxu0 0.0
        %937 = vmatmul.mubr.f32.gmra.mrb[0].mxu0 %v798
        %v938 = vpop.f32.mrb[0].mxu0
        %v939 = vadd.f32 0.0, %v938
        %v940 = vpop.f32.mrb[0].mxu0
        %v941 = vadd.f32 0.0, %v940
        %942 = vmatprep.mubr.f32.mxu0 0.0
        %943 = vmatmul.mubr.f32.gmra.mrb[0].mxu0 %v801
        %v944 = vpop.f32.mrb[0].mxu0
        %v945 = vadd.f32 0.0, %v944
        %v946 = vpop.f32.mrb[0].mxu0
        %v947 = vadd.f32 0.0, %v946
        %948 = vmatprep.mubr.f32.mxu0 0.0
        %949 = vmatmul.mubr.f32.gmra.mrb[0].mxu0 %v804
        %v950 = vpop.f32.mrb[0].mxu0
        %v951 = vadd.f32 0.0, %v950
        %v952 = vpop.f32.mrb[0].mxu0
        %v953 = vadd.f32 0.0, %v952
        %954 = vmatprep.mubr.f32.mxu0 0.0
        %955 = vmatmul.mubr.f32.gmra.mrb[0].mxu0 %v807
        %v956 = vpop.f32.mrb[0].mxu0
        %v957 = vadd.f32 0.0, %v956
        %v958 = vpop.f32.mrb[0].mxu0
        %v959 = vadd.f32 0.0, %v958
        %960 = vmatprep.mubr.f32.mxu0 0.0
        %961 = vmatmul.mubr.f32.gmra.mrb[0].mxu0 %v810
        %v962 = vpop.f32.mrb[0].mxu0
        %v963 = vadd.f32 0.0, %v962
        %v964 = vpop.f32.mrb[0].mxu0
        %v965 = vadd.f32 0.0, %v964
        %966 = vmatprep.mubr.f32.mxu0 0.0
        %967 = vmatmul.mubr.f32.gmra.mrb[0].mxu0 %v813
        %v968 = vpop.f32.mrb[0].mxu0
        %v969 = vadd.f32 0.0, %v968
        %v970 = vpop.f32.mrb[0].mxu0
        %v971 = vadd.f32 0.0, %v970
        %972 = vmatprep.mubr.f32.mxu0 0.0
        %973 = vmatmul.mubr.f32.gmra.mrb[0].mxu0 %v816
        %v974 = vpop.f32.mrb[0].mxu0
        %v975 = vadd.f32 0.0, %v974
        %v976 = vpop.f32.mrb[0].mxu0
        %v977 = vadd.f32 0.0, %v976
        %978 = vdwg.mxu0
        %v979 = vld [vmem:[#allocation6] sm:$0x3]
        %v980 = vmax.f32 %v885, %v897
        %v981 = vmax.f32 %v891, %v903
        %v982 = vmax.f32 %v980, %v909
        %v983 = vmax.f32 %v981, %v915
        %v984 = vmax.f32 %v982, %v921
        %v985 = vmax.f32 %v983, %v927
        %v986 = vmax.f32 %v984, %v933
        %v987 = vmax.f32 %v985, %v939
        %v988 = vmax.f32 %v986, %v945
        %v989 = vmax.f32 %v987, %v951
        %v990 = vmax.f32 %v988, %v957
        %v991 = vmax.f32 %v989, %v963
        %v992 = vmax.f32 %v990, %v969
        %v993 = vmax.f32 %v991, %v975
        %v994 = vmax.f32 %v992, %v993
        %v995 = vrot.slane %v994, 4
        %v996 = vmax.f32 %v994, %v995
        %v997 = vrot.slane %v996, 2
        %v998 = vmax.f32 %v996, %v997
        %v999 = vrot.slane %v998, 1
        %v1000 = vmax.f32 %v998, %v999
        %v1001 = vmax.f32 %v887, %v899
        %v1002 = vmax.f32 %v893, %v905
        %v1003 = vmax.f32 %v1001, %v911
        %v1004 = vmax.f32 %v1002, %v917
        %v1005 = vmax.f32 %v1003, %v923
        %v1006 = vmax.f32 %v1004, %v929
        %v1007 = vmax.f32 %v1005, %v935
        %v1008 = vmax.f32 %v1006, %v941
        %v1009 = vmax.f32 %v1007, %v947
        %v1010 = vmax.f32 %v1008, %v953
        %v1011 = vmax.f32 %v1009, %v959
        %v1012 = vmax.f32 %v1010, %v965
        %v1013 = vmax.f32 %v1011, %v971
        %v1014 = vmax.f32 %v1012, %v977
        %v1015 = vmax.f32 %v1013, %v1014
        %v1016 = vrot.slane %v1015, 4
        %v1017 = vmax.f32 %v1015, %v1016
        %v1018 = vrot.slane %v1017, 2
        %v1019 = vmax.f32 %v1017, %v1018
        %v1020 = vrot.slane %v1019, 1
        %v1021 = vmax.f32 %v1019, %v1020
        %v1024 = vcombine.low %v1000, %v1021
        %v1026 = vunpack.c.l.s4 1966171168
        %v1027 = vunpack.c.0.s8 %v1026
        %v1028 = vlaneseq
        %v1029 = vshrl.u32 %v1028, 7
        %v1030 = vsub.s32 %v1027, %v1029
        %v1031 = vrot.slane %v1024, %v1030
        %v1033 = vunpack.c.l.s4 1966171168
        %v1034 = vunpack.c.0.s8 %v1033
        %v1035 = vlaneseq
        %v1036 = vshrl.u32 %v1035, 7
        %v1037 = vsub.s32 %v1034, %v1036
        %v1038 = vrot.slane %v1031, %v1037
        %v1040 = vmax.f32 %v979, %v1038
        %v1042 = vlaneseq
        %v1043 = vshrl.u32 %v1042, 7
        %v1044 = vsub.s32 0, %v1043
        %v1045 = vrot.slane %v1040, %v1044
        %v1046 = vlaneseq
        %v1047 = vshrl.u32 %v1046, 7
        %v1048 = vsub.s32 1, %v1047
        %v1049 = vrot.slane %v1040, %v1048
        %v1052 = vsub.f32 %v885, %v1045
        %v1053 = vsub.f32 %v887, %v1049
        %v1054 = vsub.f32 %v891, %v1045
        %v1055 = vsub.f32 %v893, %v1049
        %v1056 = vsub.f32 %v897, %v1045
        %v1057 = vsub.f32 %v899, %v1049
        %v1058 = vsub.f32 %v903, %v1045
        %v1059 = vsub.f32 %v905, %v1049
        %v1060 = vsub.f32 %v909, %v1045
        %v1061 = vsub.f32 %v911, %v1049
        %v1062 = vsub.f32 %v915, %v1045
        %v1063 = vsub.f32 %v917, %v1049
        %v1064 = vsub.f32 %v921, %v1045
        %v1065 = vsub.f32 %v923, %v1049
        %v1066 = vsub.f32 %v927, %v1045
        %v1067 = vsub.f32 %v929, %v1049
        %v1068 = vsub.f32 %v933, %v1045
        %v1069 = vsub.f32 %v935, %v1049
        %v1070 = vsub.f32 %v939, %v1045
        %v1071 = vsub.f32 %v941, %v1049
        %v1072 = vsub.f32 %v945, %v1045
        %v1073 = vsub.f32 %v947, %v1049
        %v1074 = vsub.f32 %v951, %v1045
        %v1075 = vsub.f32 %v953, %v1049
        %v1076 = vsub.f32 %v957, %v1045
        %v1077 = vsub.f32 %v959, %v1049
        %v1078 = vsub.f32 %v963, %v1045
        %v1079 = vsub.f32 %v965, %v1049
        %v1080 = vsub.f32 %v969, %v1045
        %v1081 = vsub.f32 %v971, %v1049
        %v1082 = vsub.f32 %v975, %v1045
        %v1083 = vsub.f32 %v977, %v1049
        %v1084 = vmul.f32 %v1052, 1.442695
        %v1085 = vpow.pop %v1084
        %v1086 = vmul.f32 %v1053, 1.442695
        %v1087 = vpow.pop %v1086
        %v1088 = vmul.f32 %v1054, 1.442695
        %v1089 = vpow.pop %v1088
        %v1090 = vmul.f32 %v1055, 1.442695
        %v1091 = vpow.pop %v1090
        %v1092 = vmul.f32 %v1056, 1.442695
        %v1093 = vpow.pop %v1092
        %v1094 = vmul.f32 %v1057, 1.442695
        %v1095 = vpow.pop %v1094
        %v1096 = vmul.f32 %v1058, 1.442695
        %v1097 = vpow.pop %v1096
        %v1098 = vmul.f32 %v1059, 1.442695
        %v1099 = vpow.pop %v1098
        %v1100 = vmul.f32 %v1060, 1.442695
        %v1101 = vpow.pop %v1100
        %v1102 = vmul.f32 %v1061, 1.442695
        %v1103 = vpow.pop %v1102
        %v1104 = vmul.f32 %v1062, 1.442695
        %v1105 = vpow.pop %v1104
        %v1106 = vmul.f32 %v1063, 1.442695
        %v1107 = vpow.pop %v1106
        %v1108 = vmul.f32 %v1064, 1.442695
        %v1109 = vpow.pop %v1108
        %v1110 = vmul.f32 %v1065, 1.442695
        %v1111 = vpow.pop %v1110
        %v1112 = vmul.f32 %v1066, 1.442695
        %v1113 = vpow.pop %v1112
        %v1114 = vmul.f32 %v1067, 1.442695
        %v1115 = vpow.pop %v1114
        %v1116 = vmul.f32 %v1068, 1.442695
        %v1117 = vpow.pop %v1116
        %v1118 = vmul.f32 %v1069, 1.442695
        %v1119 = vpow.pop %v1118
        %v1120 = vmul.f32 %v1070, 1.442695
        %v1121 = vpow.pop %v1120
        %v1122 = vmul.f32 %v1071, 1.442695
        %v1123 = vpow.pop %v1122
        %v1124 = vmul.f32 %v1072, 1.442695
        %v1125 = vpow.pop %v1124
        %v1126 = vmul.f32 %v1073, 1.442695
        %v1127 = vpow.pop %v1126
        %v1128 = vmul.f32 %v1074, 1.442695
        %v1129 = vpow.pop %v1128
        %v1130 = vmul.f32 %v1075, 1.442695
        %v1131 = vpow.pop %v1130
        %v1132 = vmul.f32 %v1076, 1.442695
        %v1133 = vpow.pop %v1132
        %v1134 = vmul.f32 %v1077, 1.442695
        %v1135 = vpow.pop %v1134
        %v1136 = vmul.f32 %v1078, 1.442695
        %v1137 = vpow.pop %v1136
        %v1138 = vmul.f32 %v1079, 1.442695
        %v1139 = vpow.pop %v1138
        %v1140 = vmul.f32 %v1080, 1.442695
        %v1141 = vpow.pop %v1140
        %v1142 = vmul.f32 %v1081, 1.442695
        %v1143 = vpow.pop %v1142
        %v1144 = vmul.f32 %v1082, 1.442695
        %v1145 = vpow.pop %v1144
        %v1146 = vmul.f32 %v1083, 1.442695
        %v1147 = vpow.pop %v1146
        %v1148 = vsub.f32 %v979, %v1040
        %v1149 = vmul.f32 %v1148, 1.442695
        %v1150 = vpow.pop %v1149
        %v1151 = vld [vmem:[#allocation7] sm:$0x3]
        %v1152 = vmul.f32 %v1150, %v1151
        %v1153 = vadd.f32 %v1085, %v1089
        %v1154 = vadd.f32 %v1153, %v1093
        %v1155 = vadd.f32 %v1154, %v1097
        %v1156 = vadd.f32 %v1155, %v1101
        %v1157 = vadd.f32 %v1156, %v1105
        %v1158 = vadd.f32 %v1157, %v1109
        %v1159 = vadd.f32 %v1158, %v1113
        %v1160 = vadd.f32 %v1159, %v1117
        %v1161 = vadd.f32 %v1160, %v1121
        %v1162 = vadd.f32 %v1161, %v1125
        %v1163 = vadd.f32 %v1162, %v1129
        %v1164 = vadd.f32 %v1163, %v1133
        %v1165 = vadd.f32 %v1164, %v1137
        %v1166 = vadd.f32 %v1165, %v1141
        %v1167 = vadd.f32 %v1166, %v1145
        %v1168 = vrot.slane %v1167, 4
        %v1169 = vadd.f32 %v1167, %v1168
        %v1170 = vrot.slane %v1169, 2
        %v1171 = vadd.f32 %v1169, %v1170
        %v1172 = vrot.slane %v1171, 1
        %v1173 = vadd.f32 %v1171, %v1172
        %v1174 = vadd.f32 %v1087, %v1091
        %v1175 = vadd.f32 %v1174, %v1095
        %v1176 = vadd.f32 %v1175, %v1099
        %v1177 = vadd.f32 %v1176, %v1103
        %v1178 = vadd.f32 %v1177, %v1107
        %v1179 = vadd.f32 %v1178, %v1111
        %v1180 = vadd.f32 %v1179, %v1115
        %v1181 = vadd.f32 %v1180, %v1119
        %v1182 = vadd.f32 %v1181, %v1123
        %v1183 = vadd.f32 %v1182, %v1127
        %v1184 = vadd.f32 %v1183, %v1131
        %v1185 = vadd.f32 %v1184, %v1135
        %v1186 = vadd.f32 %v1185, %v1139
        %v1187 = vadd.f32 %v1186, %v1143
        %v1188 = vadd.f32 %v1187, %v1147
        %v1189 = vrot.slane %v1188, 4
        %v1190 = vadd.f32 %v1188, %v1189
        %v1191 = vrot.slane %v1190, 2
        %v1192 = vadd.f32 %v1190, %v1191
        %v1193 = vrot.slane %v1192, 1
        %v1194 = vadd.f32 %v1192, %v1193
        %v1197 = vcombine.low %v1173, %v1194
        %v1199 = vunpack.c.l.s4 1966171168
        %v1200 = vunpack.c.0.s8 %v1199
        %v1201 = vlaneseq
        %v1202 = vshrl.u32 %v1201, 7
        %v1203 = vsub.s32 %v1200, %v1202
        %v1204 = vrot.slane %v1197, %v1203
        %v1206 = vunpack.c.l.s4 1966171168
        %v1207 = vunpack.c.0.s8 %v1206
        %v1208 = vlaneseq
        %v1209 = vshrl.u32 %v1208, 7
        %v1210 = vsub.s32 %v1207, %v1209
        %v1211 = vrot.slane %v1204, %v1210
        %v1213 = vadd.f32 %v1152, %v1211
        %v1214 = vlaneseq
        %vm1215 = vcmp.ge.s32.totalorder %v1214, 0
        %vm1216 = vcmp.lt.s32.totalorder %v1214, 256
        %vm1217 = vmand %vm1215, %vm1216
        %1218 = vst.msk [vmem:[#allocation7] sm:$0x3] %vm1217, %v1213
        %v1219 = vld [vmem:[#allocation8] sm:$0xff]
        %v1220 = vld [vmem:[#allocation8 + $0x8] sm:$0xff]
        %v1222 = vlaneseq
        %v1223 = vshrl.u32 %v1222, 7
        %v1224 = vsub.s32 0, %v1223
        %v1225 = vrot.slane %v1150, %v1224
        %v1226 = vlaneseq
        %v1227 = vshrl.u32 %v1226, 7
        %v1228 = vsub.s32 1, %v1227
        %v1229 = vrot.slane %v1150, %v1228
        %v1232 = vmul.f32 %v1225, %v1219
        %v1233 = vmul.f32 %v1229, %v1220
        %1234 = vmatprep.subr.mxu0 %v1087
        %1235 = vmatpush1.msra.mxu0 %v1085
        %1236 = vmatprep.subr.mxu0 %v1091
        %1237 = vmatpush1.msra.mxu0 %v1089
        %1238 = vmatprep.subr.mxu0 %v1095
        %1239 = vmatpush1.msra.mxu0 %v1093
        %1240 = vmatprep.subr.mxu0 %v1099
        %1241 = vmatpush1.msra.mxu0 %v1097
        %1242 = vmatprep.subr.mxu0 %v1103
        %1243 = vmatpush1.msra.mxu0 %v1101
        %1244 = vmatprep.subr.mxu0 %v1107
        %1245 = vmatpush1.msra.mxu0 %v1105
        %1246 = vmatprep.subr.mxu0 %v1111
        %1247 = vmatpush1.msra.mxu0 %v1109
        %1248 = vmatprep.subr.mxu0 %v1115
        %1249 = vmatpush1.msra.mxu0 %v1113
        %1250 = vmatprep.subr.mxu0 %v1119
        %1251 = vmatpush1.msra.mxu0 %v1117
        %1252 = vmatprep.subr.mxu0 %v1123
        %1253 = vmatpush1.msra.mxu0 %v1121
        %1254 = vmatprep.subr.mxu0 %v1127
        %1255 = vmatpush1.msra.mxu0 %v1125
        %1256 = vmatprep.subr.mxu0 %v1131
        %1257 = vmatpush1.msra.mxu0 %v1129
        %1258 = vmatprep.subr.mxu0 %v1135
        %1259 = vmatpush1.msra.mxu0 %v1133
        %1260 = vmatprep.subr.mxu0 %v1139
        %1261 = vmatpush1.msra.mxu0 %v1137
        %1262 = vmatprep.subr.mxu0 %v1143
        %1263 = vmatpush1.msra.mxu0 %v1141
        %1264 = vmatprep.subr.mxu0 %v1147
        %1265 = vmatpush1.msra.mxu0 %v1145
        %1266 = vmatprep.subr.mxu0 0.0
        %1267 = vmatpush1.msra.mxu0 0.0
        %1268 = vmatprep.subr.mxu0 0.0
        %1269 = vmatpush1.msra.mxu0 0.0
        %1270 = vmatprep.subr.mxu0 0.0
        %1271 = vmatpush1.msra.mxu0 0.0
        %1272 = vmatprep.subr.mxu0 0.0
        %1273 = vmatpush1.msra.mxu0 0.0
        %1274 = vmatprep.subr.mxu0 0.0
        %1275 = vmatpush1.msra.mxu0 0.0
        %1276 = vmatprep.subr.mxu0 0.0
        %1277 = vmatpush1.msra.mxu0 0.0
        %1278 = vmatprep.subr.mxu0 0.0
        %1279 = vmatpush1.msra.mxu0 0.0
        %1280 = vmatprep.subr.mxu0 0.0
        %1281 = vmatpush1.msra.mxu0 0.0
        %1282 = vmatprep.subr.mxu0 0.0
        %1283 = vmatpush1.msra.mxu0 0.0
        %1284 = vmatprep.subr.mxu0 0.0
        %1285 = vmatpush1.msra.mxu0 0.0
        %1286 = vmatprep.subr.mxu0 0.0
        %1287 = vmatpush1.msra.mxu0 0.0
        %1288 = vmatprep.subr.mxu0 0.0
        %1289 = vmatpush1.msra.mxu0 0.0
        %1290 = vmatprep.subr.mxu0 0.0
        %1291 = vmatpush1.msra.mxu0 0.0
        %1292 = vmatprep.subr.mxu0 0.0
        %1293 = vmatpush1.msra.mxu0 0.0
        %1294 = vmatprep.subr.mxu0 0.0
        %1295 = vmatpush1.msra.mxu0 0.0
        %1296 = vmatprep.subr.mxu0 0.0
        %1297 = vmatpush1.msra.mxu0 0.0
        %1298 = vmatprep.mubr.f32.mxu0 0.0
        %1299 = vmatmul.mubr.f32.gmra.mrb[0].mxu0 %v736
        %v1300 = vpop.f32.mrb[0].mxu0
        %v1301 = vadd.f32 0.0, %v1300
        %v1302 = vpop.f32.mrb[0].mxu0
        %v1303 = vadd.f32 0.0, %v1302
        %1304 = vdwg.mxu0
        %v1305 = vadd.f32 %v1232, %v1301
        %v1306 = vadd.f32 %v1233, %v1303
        %1307 = vst [vmem:[#allocation8] sm:$0xff] %v1305
        %1308 = vst [vmem:[#allocation8 + $0x8] sm:$0xff] %v1306
        %1309 = vst.msk [vmem:[#allocation6] sm:$0x3] %vm1217, %v1040
        %p1310 = scmp.eq.s32.totalorder %s31, 1
        // Predicated region
        $region65: #{tpu_custom_call.1} parent=51 // pred_check
          %p1311 = pneg %p1310
        $region66: #{tpu_custom_call.1} parent=51 // pred_check_branch
          %1313 = sbr.rel (%p1311) target = $region68
        $region67: #{tpu_custom_call.1} parent=51 // pred_region
          %v1314 = vld [vmem:[%s1] ss:$2 sm:$0x3]
          %s1315 = scalar_lea.vmem %s1, 1
          %v1316 = vld [vmem:[%s1315] ss:$2 sm:$0x3]
          %v1317 = vld [vmem:[#allocation7] sm:$0x3]
          %v1318 = vrcp.pop %v1317
          %v1319 = vld [vmem:[#allocation8] sm:$0xff]
          %v1320 = vld [vmem:[#allocation8 + $0x8] sm:$0xff]
          %v1322 = vlaneseq
          %v1323 = vshrl.u32 %v1322, 7
          %v1324 = vsub.s32 0, %v1323
          %v1325 = vrot.slane %v1318, %v1324
          %v1326 = vlaneseq
          %v1327 = vshrl.u32 %v1326, 7
          %v1328 = vsub.s32 1, %v1327
          %v1329 = vrot.slane %v1318, %v1328
          %v1332 = vmul.f32 %v1319, %v1325
          %v1333 = vmul.f32 %v1320, %v1329
          %v1334 = vld [vmem:[%s4] sm:$0xff]
          %1336 = vset.pattern.permute.xlu0 0
          %1337 = vperm.xlu0 %1336, %v1334
          %v1338 = vpop.permute.xlu0 %1337
          %v1340 = vmul.f32 %v1332, %v1338
          %v1341 = vmul.f32 %v1333, %v1338
          %v1342 = vld [vmem:[%s5] sm:$0xff]
          %1344 = vset.pattern.permute.xlu0 0
          %1345 = vperm.xlu0 %1344, %v1342
          %v1346 = vpop.permute.xlu0 %1345
          %v1348 = vadd.f32 %v1340, %v1346
          %v1349 = vadd.f32 %v1341, %v1346
          %1352 = vrot.lane.b32.xlu0 %v1348, 17
          %v1353 = vpop.permute.xlu0 %1352
          %1354 = vrot.lane.b32.xlu0 %v1349, 17
          %v1355 = vpop.permute.xlu0 %1354
          %vm1356 = vcmask 138240
          %v1357 = vsel %vm1356, %v1353, %v1355
          %vm1361 = vcmask 1047688
          %1362 = vst.msk [vmem:[#allocation9] sm:$0xff] %vm1361, %v1353
          %1363 = vst [vmem:[#allocation9 + $0x8] sm:$0xff] %v1357
          %1364 = vst.msk [vmem:[#allocation9 + $0x10] sm:$0xff] %vm1356, %v1355
          %v1365 = vld [vmem:[#allocation9] sm:$0xff]
          %v1366 = vld [vmem:[#allocation9 + $0x8] sm:$0xff]
          %v1368 = vlaneseq
          %v1369 = vshrl.u32 %v1368, 7
          %v1370 = vsub.s32 0, %v1369
          %v1371 = vrot.slane %v1314, %v1370
          %v1372 = vlaneseq
          %v1373 = vshrl.u32 %v1372, 7
          %v1374 = vsub.s32 1, %v1373
          %v1375 = vrot.slane %v1314, %v1374
          %v1378 = vmul.f32 %v1365, %v1371
          %v1379 = vmul.f32 %v1366, %v1375
          %1380 = vst [vmem:[#allocation2] sm:$0xff] %v1378
          %1381 = vst [vmem:[#allocation2 + $0x8] sm:$0xff] %v1379
          %v1382 = vld [vmem:[#allocation9] sm:$0xff]
          %v1383 = vld [vmem:[#allocation9 + $0x8] sm:$0xff]
          %v1384 = vld [vmem:[#allocation9 + $0x10] sm:$0xff]
          %1388 = vrot.lane.b32.xlu0 %v1382, 127
          %v1389 = vpop.permute.xlu0 %1388
          %1390 = vrot.lane.b32.xlu0 %v1383, 127
          %v1391 = vpop.permute.xlu0 %1390
          %1392 = vrot.lane.b32.xlu0 %v1384, 127
          %v1393 = vpop.permute.xlu0 %1392
          %vm1394 = vcmask 1039360
          %v1395 = vsel %vm1394, %v1389, %v1391
          %v1396 = vsel %vm1394, %v1391, %v1393
          %1399 = vst [vmem:[#allocation2 + $0x10] sm:$0xff] %v1395
          %1400 = vst [vmem:[#allocation2 + $0x18] sm:$0xff] %v1396
          %v1401 = vld [vmem:[#allocation9] sm:$0xff]
          %v1402 = vld [vmem:[#allocation9 + $0x8] sm:$0xff]
          %v1403 = vld [vmem:[#allocation9 + $0x10] sm:$0xff]
          %v1405 = vlaneseq
          %v1406 = vshrl.u32 %v1405, 7
          %v1407 = vsub.s32 0, %v1406
          %v1408 = vrot.slane %v1316, %v1407
          %v1409 = vlaneseq
          %v1410 = vshrl.u32 %v1409, 7
          %v1411 = vsub.s32 1, %v1410
          %v1412 = vrot.slane %v1316, %v1411
          %1413 = vrot.lane.b32.xlu0 %v1408, 2
          %v1414 = vpop.permute.xlu0 %1413
          %1415 = vrot.lane.b32.xlu0 %v1412, 2
          %v1416 = vpop.permute.xlu0 %1415
          %vm1417 = vcmask 15360
          %v1418 = vsel %vm1417, %v1414, %v1416
          %v1422 = vmul.f32 %v1401, %v1414
          %v1423 = vmul.f32 %v1402, %v1418
          %v1424 = vmul.f32 %v1403, %v1416
          %1428 = vrot.lane.b32.xlu0 %v1422, 126
          %v1429 = vpop.permute.xlu0 %1428
          %1430 = vrot.lane.b32.xlu0 %v1423, 126
          %v1431 = vpop.permute.xlu0 %1430
          %1432 = vrot.lane.b32.xlu0 %v1424, 126
          %v1433 = vpop.permute.xlu0 %1432
          %vm1434 = vcmask 1031168
          %v1435 = vsel %vm1434, %v1429, %v1431
          %v1436 = vsel %vm1434, %v1431, %v1433
          %1439 = vst [vmem:[#allocation2 + $0x20] sm:$0xff] %v1435
          %1440 = vst [vmem:[#allocation2 + $0x28] sm:$0xff] %v1436
          %v1441 = vld [vmem:[#allocation9] sm:$0xff]
          %v1442 = vld [vmem:[#allocation9 + $0x8] sm:$0xff]
          %v1443 = vld [vmem:[#allocation9 + $0x10] sm:$0xff]
          %1444 = vrot.lane.b32.xlu0 %v1371, 16
          %v1445 = vpop.permute.xlu0 %1444
          %1446 = vrot.lane.b32.xlu0 %v1375, 16
          %v1447 = vpop.permute.xlu0 %1446
          %vm1448 = vcmask 130048
          %v1449 = vsel %vm1448, %v1445, %v1447
          %v1453 = vmul.f32 %v1441, %v1445
          %v1454 = vmul.f32 %v1442, %v1449
          %v1455 = vmul.f32 %v1443, %v1447
          %1459 = vrot.lane.b32.xlu0 %v1453, 112
          %v1460 = vpop.permute.xlu0 %1459
          %1461 = vrot.lane.b32.xlu0 %v1454, 112
          %v1462 = vpop.permute.xlu0 %1461
          %1463 = vrot.lane.b32.xlu0 %v1455, 112
          %v1464 = vpop.permute.xlu0 %1463
          %vm1465 = vcmask 916480
          %v1466 = vsel %vm1465, %v1460, %v1462
          %v1467 = vsel %vm1465, %v1462, %v1464
          %1470 = vst [vmem:[#allocation2 + $0x30] sm:$0xff] %v1466
          %1471 = vst [vmem:[#allocation2 + $0x38] sm:$0xff] %v1467
          %v1472 = vld [vmem:[#allocation9] sm:$0xff]
          %v1473 = vld [vmem:[#allocation9 + $0x8] sm:$0xff]
          %v1474 = vld [vmem:[#allocation9 + $0x10] sm:$0xff]
          %1478 = vrot.lane.b32.xlu0 %v1472, 111
          %v1479 = vpop.permute.xlu0 %1478
          %1480 = vrot.lane.b32.xlu0 %v1473, 111
          %v1481 = vpop.permute.xlu0 %1480
          %1482 = vrot.lane.b32.xlu0 %v1474, 111
          %v1483 = vpop.permute.xlu0 %1482
          %vm1484 = vcmask 908288
          %v1485 = vsel %vm1484, %v1479, %v1481
          %v1486 = vsel %vm1484, %v1481, %v1483
          %1489 = vst [vmem:[#allocation2 + $0x40] sm:$0xff] %v1485
          %1490 = vst [vmem:[#allocation2 + $0x48] sm:$0xff] %v1486
          %v1491 = vld [vmem:[#allocation9] sm:$0xff]
          %v1492 = vld [vmem:[#allocation9 + $0x8] sm:$0xff]
          %v1493 = vld [vmem:[#allocation9 + $0x10] sm:$0xff]
          %1494 = vrot.lane.b32.xlu0 %v1408, 18
          %v1495 = vpop.permute.xlu0 %1494
          %1496 = vrot.lane.b32.xlu0 %v1412, 18
          %v1497 = vpop.permute.xlu0 %1496
          %vm1498 = vcmask 146432
          %v1499 = vsel %vm1498, %v1495, %v1497
          %v1503 = vmul.f32 %v1491, %v1495
          %v1504 = vmul.f32 %v1492, %v1499
          %v1505 = vmul.f32 %v1493, %v1497
          %1509 = vrot.lane.b32.xlu0 %v1503, 110
          %v1510 = vpop.permute.xlu0 %1509
          %1511 = vrot.lane.b32.xlu0 %v1504, 110
          %v1512 = vpop.permute.xlu0 %1511
          %1513 = vrot.lane.b32.xlu0 %v1505, 110
          %v1514 = vpop.permute.xlu0 %1513
          %vm1515 = vcmask 900096
          %v1516 = vsel %vm1515, %v1510, %v1512
          %v1517 = vsel %vm1515, %v1512, %v1514
          %1520 = vst [vmem:[#allocation2 + $0x50] sm:$0xff] %v1516
          %1521 = vst [vmem:[#allocation2 + $0x58] sm:$0xff] %v1517
          %v1522 = vld [vmem:[#allocation9] sm:$0xff]
          %v1523 = vld [vmem:[#allocation9 + $0x8] sm:$0xff]
          %v1524 = vld [vmem:[#allocation9 + $0x10] sm:$0xff]
          %1525 = vrot.lane.b32.xlu0 %v1371, 32
          %v1526 = vpop.permute.xlu0 %1525
          %1527 = vrot.lane.b32.xlu0 %v1375, 32
          %v1528 = vpop.permute.xlu0 %1527
          %vm1529 = vcmask 261120
          %v1530 = vsel %vm1529, %v1526, %v1528
          %v1534 = vmul.f32 %v1522, %v1526
          %v1535 = vmul.f32 %v1523, %v1530
          %v1536 = vmul.f32 %v1524, %v1528
          %1540 = vrot.lane.b32.xlu0 %v1534, 96
          %v1541 = vpop.permute.xlu0 %1540
          %1542 = vrot.lane.b32.xlu0 %v1535, 96
          %v1543 = vpop.permute.xlu0 %1542
          %1544 = vrot.lane.b32.xlu0 %v1536, 96
          %v1545 = vpop.permute.xlu0 %1544
          %vm1546 = vcmask 785408
          %v1547 = vsel %vm1546, %v1541, %v1543
          %v1548 = vsel %vm1546, %v1543, %v1545
          %1551 = vst [vmem:[#allocation2 + $0x60] sm:$0xff] %v1547
          %1552 = vst [vmem:[#allocation2 + $0x68] sm:$0xff] %v1548
          %v1553 = vld [vmem:[#allocation9] sm:$0xff]
          %v1554 = vld [vmem:[#allocation9 + $0x8] sm:$0xff]
          %v1555 = vld [vmem:[#allocation9 + $0x10] sm:$0xff]
          %1559 = vrot.lane.b32.xlu0 %v1553, 95
          %v1560 = vpop.permute.xlu0 %1559
          %1561 = vrot.lane.b32.xlu0 %v1554, 95
          %v1562 = vpop.permute.xlu0 %1561
          %1563 = vrot.lane.b32.xlu0 %v1555, 95
          %v1564 = vpop.permute.xlu0 %1563
          %vm1565 = vcmask 777216
          %v1566 = vsel %vm1565, %v1560, %v1562
          %v1567 = vsel %vm1565, %v1562, %v1564
          %1570 = vst [vmem:[#allocation2 + $0x70] sm:$0xff] %v1566
          %1571 = vst [vmem:[#allocation2 + $0x78] sm:$0xff] %v1567
          %v1572 = vld [vmem:[#allocation9] sm:$0xff]
          %v1573 = vld [vmem:[#allocation9 + $0x8] sm:$0xff]
          %v1574 = vld [vmem:[#allocation9 + $0x10] sm:$0xff]
          %1575 = vrot.lane.b32.xlu0 %v1408, 34
          %v1576 = vpop.permute.xlu0 %1575
          %1577 = vrot.lane.b32.xlu0 %v1412, 34
          %v1578 = vpop.permute.xlu0 %1577
          %vm1579 = vcmask 277504
          %v1580 = vsel %vm1579, %v1576, %v1578
          %v1584 = vmul.f32 %v1572, %v1576
          %v1585 = vmul.f32 %v1573, %v1580
          %v1586 = vmul.f32 %v1574, %v1578
          %1590 = vrot.lane.b32.xlu0 %v1584, 94
          %v1591 = vpop.permute.xlu0 %1590
          %1592 = vrot.lane.b32.xlu0 %v1585, 94
          %v1593 = vpop.permute.xlu0 %1592
          %1594 = vrot.lane.b32.xlu0 %v1586, 94
          %v1595 = vpop.permute.xlu0 %1594
          %vm1596 = vcmask 769024
          %v1597 = vsel %vm1596, %v1591, %v1593
          %v1598 = vsel %vm1596, %v1593, %v1595
          %1601 = vst [vmem:[#allocation2 + $0x80] sm:$0xff] %v1597
          %1602 = vst [vmem:[#allocation2 + $0x88] sm:$0xff] %v1598
          %v1603 = vld [vmem:[%s3] sm:$0xff]
          %v1604 = vld [vmem:[#allocation2] sm:$0xff]
          %v1605 = vld [vmem:[#allocation2 + $0x8] sm:$0xff]
          %v1606 = vld [vmem:[#allocation2 + $0x10] sm:$0xff]
          %v1607 = vld [vmem:[#allocation2 + $0x18] sm:$0xff]
          %v1608 = vld [vmem:[#allocation2 + $0x20] sm:$0xff]
          %v1609 = vld [vmem:[#allocation2 + $0x28] sm:$0xff]
          %v1610 = vld [vmem:[#allocation2 + $0x30] sm:$0xff]
          %v1611 = vld [vmem:[#allocation2 + $0x38] sm:$0xff]
          %v1612 = vld [vmem:[#allocation2 + $0x40] sm:$0xff]
          %v1613 = vld [vmem:[#allocation2 + $0x48] sm:$0xff]
          %v1614 = vld [vmem:[#allocation2 + $0x50] sm:$0xff]
          %v1615 = vld [vmem:[#allocation2 + $0x58] sm:$0xff]
          %v1616 = vld [vmem:[#allocation2 + $0x60] sm:$0xff]
          %v1617 = vld [vmem:[#allocation2 + $0x68] sm:$0xff]
          %v1618 = vld [vmem:[#allocation2 + $0x70] sm:$0xff]
          %v1619 = vld [vmem:[#allocation2 + $0x78] sm:$0xff]
          %v1620 = vld [vmem:[#allocation2 + $0x80] sm:$0xff]
          %v1621 = vld [vmem:[#allocation2 + $0x88] sm:$0xff]
          %vm1622 = vcmask 588800
          %v1624 = vsel %vm1622, %v1603, 0
          %1626 = vmatprep.subr.mxu0 %v1605
          %1627 = vmatpush1.msra.mxu0 %v1604
          %1628 = vmatprep.subr.mxu0 %v1607
          %1629 = vmatpush1.msra.mxu0 %v1606
          %1630 = vmatprep.subr.mxu0 %v1609
          %1631 = vmatpush1.msra.mxu0 %v1608
          %1632 = vmatprep.subr.mxu0 %v1611
          %1633 = vmatpush1.msra.mxu0 %v1610
          %1634 = vmatprep.subr.mxu0 %v1613
          %1635 = vmatpush1.msra.mxu0 %v1612
          %1636 = vmatprep.subr.mxu0 %v1615
          %1637 = vmatpush1.msra.mxu0 %v1614
          %1638 = vmatprep.subr.mxu0 %v1617
          %1639 = vmatpush1.msra.mxu0 %v1616
          %1640 = vmatprep.subr.mxu0 %v1619
          %1641 = vmatpush1.msra.mxu0 %v1618
          %1642 = vmatprep.subr.mxu0 %v1621
          %1643 = vmatpush1.msra.mxu0 %v1620
          %1644 = vmatprep.subr.mxu0 0.0
          %1645 = vmatpush1.msra.mxu0 0.0
          %1646 = vmatprep.subr.mxu0 0.0
          %1647 = vmatpush1.msra.mxu0 0.0
          %1648 = vmatprep.subr.mxu0 0.0
          %1649 = vmatpush1.msra.mxu0 0.0
          %1650 = vmatprep.subr.mxu0 0.0
          %1651 = vmatpush1.msra.mxu0 0.0
          %1652 = vmatprep.subr.mxu0 0.0
          %1653 = vmatpush1.msra.mxu0 0.0
          %1654 = vmatprep.subr.mxu0 0.0
          %1655 = vmatpush1.msra.mxu0 0.0
          %1656 = vmatprep.subr.mxu0 0.0
          %1657 = vmatpush1.msra.mxu0 0.0
          %1658 = vmatprep.subr.mxu0 0.0
          %1659 = vmatpush1.msra.mxu0 0.0
          %1660 = vmatprep.subr.mxu0 0.0
          %1661 = vmatpush1.msra.mxu0 0.0
          %1662 = vmatprep.subr.mxu0 0.0
          %1663 = vmatpush1.msra.mxu0 0.0
          %1664 = vmatprep.subr.mxu0 0.0
          %1665 = vmatpush1.msra.mxu0 0.0
          %1666 = vmatprep.subr.mxu0 0.0
          %1667 = vmatpush1.msra.mxu0 0.0
          %1668 = vmatprep.subr.mxu0 0.0
          %1669 = vmatpush1.msra.mxu0 0.0
          %1670 = vmatprep.subr.mxu0 0.0
          %1671 = vmatpush1.msra.mxu0 0.0
          %1672 = vmatprep.subr.mxu0 0.0
          %1673 = vmatpush1.msra.mxu0 0.0
          %1674 = vmatprep.subr.mxu0 0.0
          %1675 = vmatpush1.msra.mxu0 0.0
          %1676 = vmatprep.subr.mxu0 0.0
          %1677 = vmatpush1.msra.mxu0 0.0
          %1678 = vmatprep.subr.mxu0 0.0
          %1679 = vmatpush1.msra.mxu0 0.0
          %1680 = vmatprep.subr.mxu0 0.0
          %1681 = vmatpush1.msra.mxu0 0.0
          %1682 = vmatprep.subr.mxu0 0.0
          %1683 = vmatpush1.msra.mxu0 0.0
          %1684 = vmatprep.subr.mxu0 0.0
          %1685 = vmatpush1.msra.mxu0 0.0
          %1686 = vmatprep.subr.mxu0 0.0
          %1687 = vmatpush1.msra.mxu0 0.0
          %1688 = vmatprep.subr.mxu0 0.0
          %1689 = vmatpush1.msra.mxu0 0.0
          %1690 = vmatprep.mubr.f32.mxu0 0.0
          %1691 = vmatmul.mubr.f32.gmra.mrb[0].mxu0 %v1624
          %v1692 = vpop.f32.mrb[0].mxu0
          %v1693 = vadd.f32 0.0, %v1692
          %v1694 = vpop.f32.mrb[0].mxu0
          %v1695 = vadd.f32 0.0, %v1694
          %1696 = vdwg.mxu0
          %v1697 = vld [vmem:[%s312] sm:$0xff]
          %v1698 = vld [vmem:[%s312 + $0x8] sm:$0xff]
          %v1699 = vld [vmem:[%s312 + $0x10] sm:$0xff]
          %v1700 = vld [vmem:[%s6] sm:$0xff]
          %1702 = vset.pattern.permute.xlu0 0
          %1703 = vperm.xlu0 %1702, %v1700
          %v1704 = vpop.permute.xlu0 %1703
          %v1706 = vmul.f32 %v1693, %v1704
          %v1707 = vmul.f32 %v1695, %v1704
          %v1708 = vld [vmem:[%s7] sm:$0xff]
          %1710 = vset.pattern.permute.xlu0 0
          %1711 = vperm.xlu0 %1710, %v1708
          %v1712 = vpop.permute.xlu0 %1711
          %v1714 = vadd.f32 %v1706, %v1712
          %v1715 = vadd.f32 %v1707, %v1712
          %1719 = vrot.lane.b32.xlu0 %v1697, 111
          %v1720 = vpop.permute.xlu0 %1719
          %1721 = vrot.lane.b32.xlu0 %v1698, 111
          %v1722 = vpop.permute.xlu0 %1721
          %1723 = vrot.lane.b32.xlu0 %v1699, 111
          %v1724 = vpop.permute.xlu0 %1723
          %v1725 = vsel %vm1484, %v1720, %v1722
          %v1726 = vsel %vm1484, %v1722, %v1724
          %v1729 = vadd.f32 %v1714, %v1725
          %v1730 = vadd.f32 %v1715, %v1726
          %v1733 = vcombine.low %v1729, %v1730
          %1735 = vst [vmem:[%s348] sm:$0xff] %v1733
        $region68: #{tpu_custom_call.1} parent=51 // pred_fallthru
          _
        %s1736 = sand.u32 %s219, 1
        %s1737 = scalar_lea.sflag [#allocation12], %s1736
        %s1738 = sand.u32 %s219, 1
        %s1739 = smul.addr %s1738, 8
        %s1740 = scalar_lea.vmem [#allocation15], %s1739
        // Predicated region
        $region69: #{tpu_custom_call.1} parent=51 // pred_check
          %p1741 = pneg %p229
        $region70: #{tpu_custom_call.1} parent=51 // pred_check_branch
          %1743 = sbr.rel (%p1741) target = $region72
        $region71: #{tpu_custom_call.1} parent=51 // pred_region
          %s1745 = ssub.s32 128, 128
          %1746 = vsyncadd %s1737, %s1745
          %s1747 = smul.addr %s30, 2
          %s1748 = smul.addr %s1747, 64
          %s1749 = scalar_lea.hbm %s8, %s1748
          %s1751 = sshll.u32 %s1740, 4
          %s1752 = int_to_ptr.vmem [resolvable:$true] %s1751
          %1754 = dma.vmem_to_hbm [thread:$0]  %s1752, 128, %s1749, %s1737
        $region72: #{tpu_custom_call.1} parent=51 // pred_fallthru
          _
      $region52: #{tpu_custom_call.1} parent=5 // pred_fallthru
        _
      %p1755 = scmp.le.s32.totalorder 2, %s21
      // Predicated region
      $region73: #{tpu_custom_call.1} parent=5 // pred_check
        %p1756 = pneg %p1755
      $region74: #{tpu_custom_call.1} parent=5 // pred_check_branch
        %1758 = sbr.rel (%p1756) target = $region76
      $region75: #{tpu_custom_call.1} parent=5 // pred_region
        %s1759 = ssub.s32 %s21, 2
        // Predicated region
        $region77: #{tpu_custom_call.1} parent=75 // pred_check
          %p1760 = pneg %p235
        $region78: #{tpu_custom_call.1} parent=75 // pred_check_branch
          %1762 = sbr.rel (%p1760) target = $region80
        $region79: #{tpu_custom_call.1} parent=75 // pred_region
          %s1763 = sand.u32 %s220, 1
          %s1764 = scalar_lea.sflag [#allocation12], %s1763
          %s1765 = sand.u32 %s220, 1
          %s1766 = smul.addr %s1765, 8
          %s1767 = scalar_lea.vmem [#allocation15], %s1766
          %1768 = dma.done %s1764, 128
        $region80: #{tpu_custom_call.1} parent=75 // pred_fallthru
          _
      $region76: #{tpu_custom_call.1} parent=5 // pred_fallthru
        _
    $region6: #{tpu_custom_call.1} parent=1 // loop_footer
      %s25 = sadd.s32 1, %s21
    $region7: #{tpu_custom_call.1} parent=1 // loop_footer_branch
      %20 = sbr.rel target = $region3
    $region8: #{tpu_custom_call.1} parent=1 // loop_exit
      _
    %1769 = vsyncpa [#allocation11], 1
    %s1770 = scalar_lea.sflag [#allocation11], 1
    %1771 = vsyncpa %s1770, 1
    %1772 = vsyncpa [#allocation14], 1
    %1773 = vsyncpa [#allocation12], 1
    %s1774 = scalar_lea.sflag [#allocation12], 1
    %1775 = vsyncpa %s1774, 1

</llo_original>
